<compile_context>
chip_gen: v7x
topology: tpu7x:2x2x1
jax: 0.10.0
libtpu: 0.0.40
codegen_flags: <defaults>
</compile_context>

<pallas_src>
import jax
import jax.numpy as jnp
from jax.experimental import pallas as pl
from jax.experimental.pallas import tpu as pltpu

HIDDEN = 512
NUM_LAYERS = 4
BN_EPS = 1e-5
H3 = 3 * HIDDEN


# ----------------------------- Pallas kernel --------------------------------

def fused_forward_kernel(x_ref, w0_ref, wq_ref, ws_ref, b_ref, gamma_ref,
                         beta_ref, wfcq_ref, wfcs_ref, bfc_ref, out_ref,
                         act_ref):
    """grid = (NUM_LAYERS,); activation carried across layers in `act_ref`.

    x:      (B, NC)       f32   input (seq_len == 1)
    w0:     (NC, 3H)      bf16  layer-0 W_ih, [i, g, o] columns (f-gate dropped)
    wq:     (1, H, 3H)    int8  layer-l (l>=1) quantized W_ih slab [i, g, o]
    ws:     (1, 1, 3H)    f32   per-output-channel dequant scales for wq
    b:      (1, 1, 3H)    f32   layer-l  b_ih + b_hh, [i, g, o]
    gamma/beta: (1, H)    f32   BatchNorm1d affine
    wfcq:   (H, C_PAD)    int8  quantized Linear weight (zero-padded columns)
    wfcs:   (1, C_PAD)    f32   per-column scales for wfcq
    bfc:    (1, C_PAD)    f32   Linear bias (zero-padded)
    out:    (B, C_PAD)    f32
    act:    (B, H)        f32   VMEM scratch (carried hidden state)
    """
    l = pl.program_id(0)
    H = HIDDEN

    def cell_from_gates(gates):
        # h0 = c0 = 0  =>  no W_hh term, no forget gate, c = i * g.
        i_g = jax.nn.sigmoid(gates[:, 0 * H:1 * H])
        g_g = jnp.tanh(gates[:, 1 * H:2 * H])
        o_g = jax.nn.sigmoid(gates[:, 2 * H:3 * H])
        return o_g * jnp.tanh(i_g * g_g)

    @pl.when(l == 0)
    def _():
        gates = jnp.dot(x_ref[...].astype(jnp.bfloat16), w0_ref[...],
                        preferred_element_type=jnp.float32) + b_ref[0]
        act_ref[...] = cell_from_gates(gates)

    @pl.when(l > 0)
    def _():
        # int8 -> bf16 dequant (values <= 127 are exact in bf16); the
        # per-output-channel scale is folded into the post-matmul.
        w = wq_ref[0].astype(jnp.bfloat16)
        gates = jnp.dot(act_ref[...].astype(jnp.bfloat16), w,
                        preferred_element_type=jnp.float32)
        gates = gates * ws_ref[0] + b_ref[0]
        act_ref[...] = cell_from_gates(gates)

    @pl.when(l == NUM_LAYERS - 1)
    def _():
        h = act_ref[...]
        # BatchNorm1d, training-mode batch statistics (biased variance).
        mean = jnp.mean(h, axis=0, keepdims=True)
        var = jnp.mean((h - mean) ** 2, axis=0, keepdims=True)
        xn = (h - mean) * jax.lax.rsqrt(var + BN_EPS)
        xn = xn * gamma_ref[...] + beta_ref[...]
        # Softmax over features (nn.Softmax() legacy default dim=1 for 2-D).
        m = jnp.max(xn, axis=1, keepdims=True)
        e = jnp.exp(xn - m)
        p = e / jnp.sum(e, axis=1, keepdims=True)
        logits = jnp.dot(p.astype(jnp.bfloat16),
                         wfcq_ref[...].astype(jnp.bfloat16),
                         preferred_element_type=jnp.float32)
        out_ref[...] = logits * wfcs_ref[...] + bfc_ref[...]


# ------------------------------ JAX wrappers ---------------------------------

def _fused_call(x2, w0, wq_stack, ws_stack, b_stack, gamma, beta,
                wfc_q, wfc_s, b_fc):
    B, NC = x2.shape
    C_PAD = wfc_q.shape[1]
    return pl.pallas_call(
        fused_forward_kernel,
        out_shape=jax.ShapeDtypeStruct((B, C_PAD), jnp.float32),
        grid_spec=pltpu.PrefetchScalarGridSpec(
            num_scalar_prefetch=0,
            grid=(NUM_LAYERS,),
            in_specs=[
                pl.BlockSpec((B, NC), lambda l: (0, 0)),                 # x
                pl.BlockSpec((NC, H3), lambda l: (0, 0)),                # w0 (bf16)
                pl.BlockSpec((1, HIDDEN, H3),                            # int8 W, layers 1..3
                             lambda l: (jnp.maximum(l - 1, 0), 0, 0)),
                pl.BlockSpec((1, 1, H3),                                 # dequant scales
                             lambda l: (jnp.maximum(l - 1, 0), 0, 0)),
                pl.BlockSpec((1, 1, H3), lambda l: (l, 0, 0)),           # bias per layer
                pl.BlockSpec((1, HIDDEN), lambda l: (0, 0)),             # bn gamma
                pl.BlockSpec((1, HIDDEN), lambda l: (0, 0)),             # bn beta
                pl.BlockSpec((HIDDEN, C_PAD), lambda l: (0, 0)),         # fc weight (int8)
                pl.BlockSpec((1, C_PAD), lambda l: (0, 0)),              # fc scales
                pl.BlockSpec((1, C_PAD), lambda l: (0, 0)),              # fc bias
            ],
            out_specs=pl.BlockSpec((B, C_PAD), lambda l: (0, 0)),
            scratch_shapes=[pltpu.VMEM((B, HIDDEN), jnp.float32)],
        ),
        compiler_params=pltpu.CompilerParams(
            dimension_semantics=("arbitrary",)),
    )(x2, w0, wq_stack, ws_stack, b_stack, gamma, beta, wfc_q, wfc_s, b_fc)


@jax.jit
def model_forward(params, x):
    """x: (B, 1, num_classes)  ->  (B, num_classes)."""
    B, S, NC = x.shape
    assert S == 1, "flatten + BatchNorm1d(hidden) requires seq_len == 1"
    out = _fused_call(x[:, 0, :], params["w0"], params["wq_stack"],
                      params["ws_stack"], params["b_stack"],
                      params["bn_gamma"], params["bn_beta"],
                      params["wfc_q"], params["wfc_s"], params["b_fc"])
    return out[:, :NC]


def _quantize_cols(w):
    """Per-output-channel symmetric int8 quantization of a (in, out) matrix."""
    maxabs = jnp.max(jnp.abs(w), axis=0, keepdims=True)        # (1, out)
    scale = jnp.maximum(maxabs, 1e-8) / 127.0
    q = jnp.clip(jnp.round(w / scale), -127.0, 127.0).astype(jnp.int8)
    return q, scale


def init_params(key, num_classes):
    """Deterministic init mirroring the PyTorch module's shapes (W_hh skipped:
    it never influences the forward because init_hidden() is all zeros)."""
    H = HIDDEN
    stdv = 1.0 / (H ** 0.5)

    def igo_rows(a4h):  # PyTorch gate order [i, f, g, o] -> keep [i, g, o]
        return jnp.concatenate([a4h[0:H], a4h[2 * H:4 * H]], axis=0)

    w_layers, b_layers = [], []
    for layer in range(NUM_LAYERS):
        in_dim = num_classes if layer == 0 else H
        key, k1, k3, k4 = jax.random.split(key, 4)
        w_ih = jax.random.uniform(k1, (4 * H, in_dim), jnp.float32, -stdv, stdv)
        b_ih = jax.random.uniform(k3, (4 * H,), jnp.float32, -stdv, stdv)
        b_hh = jax.random.uniform(k4, (4 * H,), jnp.float32, -stdv, stdv)
        w_layers.append(jnp.transpose(igo_rows(w_ih)))                # (in, 3H)
        b_layers.append(igo_rows(b_ih + b_hh).reshape(1, 3 * H))      # (1, 3H)

    wq_list, ws_list = [], []
    for w in w_layers[1:]:
        q, s = _quantize_cols(w)
        wq_list.append(q)
        ws_list.append(s.reshape(1, 1, 3 * H))

    params = {
        "w0": w_layers[0].astype(jnp.bfloat16),                       # (NC,3H) bf16
        "wq_stack": jnp.stack(wq_list, 0),                            # (3,H,3H) int8
        "ws_stack": jnp.concatenate(ws_list, 0),                      # (3,1,3H) f32
        "b_stack": jnp.stack(b_layers, 0),                            # (4,1,3H) f32
        "bn_gamma": jnp.ones((1, H), jnp.float32),                    # BN default init
        "bn_beta": jnp.zeros((1, H), jnp.float32),
    }
    # Linear(H, C): lane-pad C up to a multiple of 128 (zero columns), int8.
    c_pad = max(128, ((num_classes + 127) // 128) * 128)
    key, k5, k6 = jax.random.split(key, 3)
    w_fc = jax.random.uniform(k5, (num_classes, H), jnp.float32, -stdv, stdv)
    b_fc = jax.random.uniform(k6, (num_classes,), jnp.float32, -stdv, stdv)
    w_fc_pad = jnp.zeros((H, c_pad), jnp.float32).at[:, :num_classes].set(
        jnp.transpose(w_fc))
    wfc_q, wfc_s = _quantize_cols(w_fc_pad)
    params["wfc_q"] = wfc_q                                           # (H,C_PAD) int8
    params["wfc_s"] = wfc_s                                           # (1,C_PAD) f32
    params["b_fc"] = jnp.zeros((1, c_pad), jnp.float32).at[0, :num_classes].set(b_fc)
    return params


# ------------------------------- reference -----------------------------------

def reference_forward(params, x):
    """Pure-JAX reference mirroring the kernel's math (incl. int8 dequant and
    bf16 matmul casts).  NOTE: int8/bf16 storage deviates slightly from the f32
    PyTorch module; validate end-task accuracy if bit-level fidelity matters."""
    NC = x.shape[2]
    H = HIDDEN

    def cell_from_gates(gates):
        i_g = jax.nn.sigmoid(gates[:, 0 * H:1 * H])
        g_g = jnp.tanh(gates[:, 1 * H:2 * H])
        o_g = jax.nn.sigmoid(gates[:, 2 * H:3 * H])
        return o_g * jnp.tanh(i_g * g_g)

    gates = jnp.dot(x[:, 0, :].astype(jnp.bfloat16), params["w0"],
                    preferred_element_type=jnp.float32) + params["b_stack"][0, 0]
    h = cell_from_gates(gates)
    for l in range(1, NUM_LAYERS):
        w = params["wq_stack"][l - 1].astype(jnp.bfloat16)
        gates = jnp.dot(h.astype(jnp.bfloat16), w,
                        preferred_element_type=jnp.float32)
        gates = gates * params["ws_stack"][l - 1] + params["b_stack"][l, 0]
        h = cell_from_gates(gates)
    mean = jnp.mean(h, axis=0, keepdims=True)
    var = jnp.mean((h - mean) ** 2, axis=0, keepdims=True)
    xn = (h - mean) * jax.lax.rsqrt(var + BN_EPS)
    xn = xn * params["bn_gamma"] + params["bn_beta"]
    p = jax.nn.softmax(xn, axis=1)
    out = jnp.dot(p.astype(jnp.bfloat16), params["wfc_q"].astype(jnp.bfloat16),
                  preferred_element_type=jnp.float32)
    out = out * params["wfc_s"] + params["b_fc"]
    return out[:, :NC]


if __name__ == "__main__":
    NUM_CLASSES = 10
    BATCH = 8   # sublane-aligned (f32 sublane = 8); kernel is shape-generic in B

    key = jax.random.PRNGKey(0)
    key, pkey, xkey = jax.random.split(key, 3)
    params = init_params(pkey, NUM_CLASSES)
    x = jax.random.normal(xkey, (BATCH, 1, NUM_CLASSES), jnp.float32)

    out = model_forward(params, x)
    out = jax.block_until_ready(out)

    ref = reference_forward(params, x)
    assert out.shape == (BATCH, NUM_CLASSES), out.shape
    assert jnp.allclose(out, ref, atol=1e-3, rtol=1e-3), (
        float(jnp.max(jnp.abs(out - ref))))

    print("KERNEL_OK")
</pallas_src>

<mosaic_0001>
module attributes {stable_mosaic.version = 11 : i64} {
  func.func @fused_forward_kernel(%arg0: i32, %arg1: memref<8x10xf32, #tpu.memory_space<vmem>>, %arg2: memref<10x1536xbf16, #tpu.memory_space<vmem>>, %arg3: memref<1x512x1536xi8, #tpu.memory_space<vmem>>, %arg4: memref<1x1x1536xf32, #tpu.memory_space<vmem>>, %arg5: memref<1x1x1536xf32, #tpu.memory_space<vmem>>, %arg6: memref<1x512xf32, #tpu.memory_space<vmem>>, %arg7: memref<1x512xf32, #tpu.memory_space<vmem>>, %arg8: memref<512x128xi8, #tpu.memory_space<vmem>>, %arg9: memref<1x128xf32, #tpu.memory_space<vmem>>, %arg10: memref<1x128xf32, #tpu.memory_space<vmem>>, %arg11: memref<8x128xf32, #tpu.memory_space<vmem>>, %arg12: memref<8x512xf32, #tpu.memory_space<vmem>>) attributes {dimension_semantics = [#tpu.dimension_semantics<arbitrary>], iteration_bounds = array<i64: 4>, scalar_prefetch = 0 : i64, scratch_operands = 1 : i64, tpu.core_type = #tpu.core_type<tc>, window_params = [{pipeline_mode = #tpu.pipeline_mode<synchronous>, transform_indices = @transform_0, window_bounds = array<i64: 8, 10>}, {pipeline_mode = #tpu.pipeline_mode<synchronous>, transform_indices = @transform_1, window_bounds = array<i64: 10, 1536>}, {transform_indices = @transform_2, window_bounds = array<i64: 1, 512, 1536>}, {transform_indices = @transform_3, window_bounds = array<i64: 1, 1, 1536>}, {transform_indices = @transform_4, window_bounds = array<i64: 1, 1, 1536>}, {pipeline_mode = #tpu.pipeline_mode<synchronous>, transform_indices = @transform_5, window_bounds = array<i64: 1, 512>}, {pipeline_mode = #tpu.pipeline_mode<synchronous>, transform_indices = @transform_6, window_bounds = array<i64: 1, 512>}, {pipeline_mode = #tpu.pipeline_mode<synchronous>, transform_indices = @transform_7, window_bounds = array<i64: 512, 128>}, {pipeline_mode = #tpu.pipeline_mode<synchronous>, transform_indices = @transform_8, window_bounds = array<i64: 1, 128>}, {pipeline_mode = #tpu.pipeline_mode<synchronous>, transform_indices = @transform_9, window_bounds = array<i64: 1, 128>}, {pipeline_mode = #tpu.pipeline_mode<synchronous>, transform_indices = @transform_10, window_bounds = array<i64: 8, 128>}]} {
    %c0_i32 = arith.constant 0 : i32
    %0 = arith.cmpi eq, %arg0, %c0_i32 : i32
    %1 = arith.extui %0 : i1 to i32
    %c0_i32_0 = arith.constant 0 : i32
    %2 = arith.cmpi ne, %1, %c0_i32_0 : i32
    scf.if %2 {
      %c0 = arith.constant 0 : index
      %c0_4 = arith.constant 0 : index
      %9 = vector.load %arg1[%c0, %c0_4] : memref<8x10xf32, #tpu.memory_space<vmem>>, vector<8x10xf32>
      %10 = arith.truncf %9 : vector<8x10xf32> to vector<8x10xbf16>
      %c0_5 = arith.constant 0 : index
      %c0_6 = arith.constant 0 : index
      %11 = vector.load %arg2[%c0_5, %c0_6] : memref<10x1536xbf16, #tpu.memory_space<vmem>>, vector<10x1536xbf16>
      %cst = arith.constant dense<0.000000e+00> : vector<8x1536xf32>
      %12 = tpu.matmul %10, %11, %cst {dimension_numbers = #tpu.dot_dimension_numbers<[1], [0], [0], [1], [0, 0, 1, 1], [], []>} : vector<8x10xbf16>, vector<10x1536xbf16>, vector<8x1536xf32> -> vector<8x1536xf32>
      %c0_7 = arith.constant 0 : index
      %c0_8 = arith.constant 0 : index
      %c0_9 = arith.constant 0 : index
      %13 = vector.load %arg5[%c0_7, %c0_8, %c0_9] : memref<1x1x1536xf32, #tpu.memory_space<vmem>>, vector<1x1x1536xf32>
      %14 = vector.shape_cast %13 : vector<1x1x1536xf32> to vector<1x1536xf32>
      %15 = vector.broadcast %14 : vector<1x1536xf32> to vector<8x1536xf32>
      %16 = arith.addf %12, %15 : vector<8x1536xf32>
      %17 = vector.extract_strided_slice %16 {offsets = [0, 0], sizes = [8, 512], strides = [1, 1]} : vector<8x1536xf32> to vector<8x512xf32>
      %18 = arith.negf %17 : vector<8x512xf32>
      %19 = math.exp %18 : vector<8x512xf32>
      %cst_10 = arith.constant 1.000000e+00 : f32
      %20 = vector.broadcast %cst_10 : f32 to vector<8x512xf32>
      %21 = arith.addf %20, %19 : vector<8x512xf32>
      %22 = arith.divf %20, %21 : vector<8x512xf32>
      %23 = vector.extract_strided_slice %16 {offsets = [0, 512], sizes = [8, 512], strides = [1, 1]} : vector<8x1536xf32> to vector<8x512xf32>
      %24 = math.tanh %23 : vector<8x512xf32>
      %25 = vector.extract_strided_slice %16 {offsets = [0, 1024], sizes = [8, 512], strides = [1, 1]} : vector<8x1536xf32> to vector<8x512xf32>
      %26 = arith.negf %25 : vector<8x512xf32>
      %27 = math.exp %26 : vector<8x512xf32>
      %cst_11 = arith.constant 1.000000e+00 : f32
      %28 = vector.broadcast %cst_11 : f32 to vector<8x512xf32>
      %29 = arith.addf %28, %27 : vector<8x512xf32>
      %30 = arith.divf %28, %29 : vector<8x512xf32>
      %31 = arith.mulf %22, %24 : vector<8x512xf32>
      %32 = math.tanh %31 : vector<8x512xf32>
      %33 = arith.mulf %30, %32 : vector<8x512xf32>
      %c0_12 = arith.constant 0 : index
      %c0_13 = arith.constant 0 : index
      %34 = vector.load %arg12[%c0_12, %c0_13] : memref<8x512xf32, #tpu.memory_space<vmem>>, vector<8x512xf32>
      tpu.vector_store %arg12[%c0_12, %c0_13], %33 {strides = array<i32>} : memref<8x512xf32, #tpu.memory_space<vmem>>, vector<8x512xf32>,
    } else {
    }
    %c0_i32_1 = arith.constant 0 : i32
    %3 = arith.cmpi sgt, %arg0, %c0_i32_1 : i32
    %4 = arith.extui %3 : i1 to i32
    %c0_i32_2 = arith.constant 0 : i32
    %5 = arith.cmpi ne, %4, %c0_i32_2 : i32
    scf.if %5 {
      %c0 = arith.constant 0 : index
      %c0_4 = arith.constant 0 : index
      %c0_5 = arith.constant 0 : index
      %9 = vector.load %arg3[%c0, %c0_4, %c0_5] : memref<1x512x1536xi8, #tpu.memory_space<vmem>>, vector<1x512x1536xi8>
      %10 = vector.shape_cast %9 : vector<1x512x1536xi8> to vector<512x1536xi8>
      %11 = arith.sitofp %10 : vector<512x1536xi8> to vector<512x1536xbf16>
      %c0_6 = arith.constant 0 : index
      %c0_7 = arith.constant 0 : index
      %12 = vector.load %arg12[%c0_6, %c0_7] : memref<8x512xf32, #tpu.memory_space<vmem>>, vector<8x512xf32>
      %13 = arith.truncf %12 : vector<8x512xf32> to vector<8x512xbf16>
      %cst = arith.constant dense<0.000000e+00> : vector<8x1536xf32>
      %14 = tpu.matmul %13, %11, %cst {dimension_numbers = #tpu.dot_dimension_numbers<[1], [0], [0], [1], [0, 0, 1, 1], [], []>} : vector<8x512xbf16>, vector<512x1536xbf16>, vector<8x1536xf32> -> vector<8x1536xf32>
      %c0_8 = arith.constant 0 : index
      %c0_9 = arith.constant 0 : index
      %c0_10 = arith.constant 0 : index
      %15 = vector.load %arg4[%c0_8, %c0_9, %c0_10] : memref<1x1x1536xf32, #tpu.memory_space<vmem>>, vector<1x1x1536xf32>
      %16 = vector.shape_cast %15 : vector<1x1x1536xf32> to vector<1x1536xf32>
      %17 = vector.broadcast %16 : vector<1x1536xf32> to vector<8x1536xf32>
      %18 = arith.mulf %14, %17 : vector<8x1536xf32>
      %c0_11 = arith.constant 0 : index
      %c0_12 = arith.constant 0 : index
      %c0_13 = arith.constant 0 : index
      %19 = vector.load %arg5[%c0_11, %c0_12, %c0_13] : memref<1x1x1536xf32, #tpu.memory_space<vmem>>, vector<1x1x1536xf32>
      %20 = vector.shape_cast %19 : vector<1x1x1536xf32> to vector<1x1536xf32>
      %21 = vector.broadcast %20 : vector<1x1536xf32> to vector<8x1536xf32>
      %22 = arith.addf %18, %21 : vector<8x1536xf32>
      %23 = vector.extract_strided_slice %22 {offsets = [0, 0], sizes = [8, 512], strides = [1, 1]} : vector<8x1536xf32> to vector<8x512xf32>
      %24 = arith.negf %23 : vector<8x512xf32>
      %25 = math.exp %24 : vector<8x512xf32>
      %cst_14 = arith.constant 1.000000e+00 : f32
      %26 = vector.broadcast %cst_14 : f32 to vector<8x512xf32>
      %27 = arith.addf %26, %25 : vector<8x512xf32>
      %28 = arith.divf %26, %27 : vector<8x512xf32>
      %29 = vector.extract_strided_slice %22 {offsets = [0, 512], sizes = [8, 512], strides = [1, 1]} : vector<8x1536xf32> to vector<8x512xf32>
      %30 = math.tanh %29 : vector<8x512xf32>
      %31 = vector.extract_strided_slice %22 {offsets = [0, 1024], sizes = [8, 512], strides = [1, 1]} : vector<8x1536xf32> to vector<8x512xf32>
      %32 = arith.negf %31 : vector<8x512xf32>
      %33 = math.exp %32 : vector<8x512xf32>
      %cst_15 = arith.constant 1.000000e+00 : f32
      %34 = vector.broadcast %cst_15 : f32 to vector<8x512xf32>
      %35 = arith.addf %34, %33 : vector<8x512xf32>
      %36 = arith.divf %34, %35 : vector<8x512xf32>
      %37 = arith.mulf %28, %30 : vector<8x512xf32>
      %38 = math.tanh %37 : vector<8x512xf32>
      %39 = arith.mulf %36, %38 : vector<8x512xf32>
      %c0_16 = arith.constant 0 : index
      %c0_17 = arith.constant 0 : index
      %40 = vector.load %arg12[%c0_16, %c0_17] : memref<8x512xf32, #tpu.memory_space<vmem>>, vector<8x512xf32>
      tpu.vector_store %arg12[%c0_16, %c0_17], %39 {strides = array<i32>} : memref<8x512xf32, #tpu.memory_space<vmem>>, vector<8x512xf32>,
    } else {
    }
    %c3_i32 = arith.constant 3 : i32
    %6 = arith.cmpi eq, %arg0, %c3_i32 : i32
    %7 = arith.extui %6 : i1 to i32
    %c0_i32_3 = arith.constant 0 : i32
    %8 = arith.cmpi ne, %7, %c0_i32_3 : i32
    scf.if %8 {
      %c0 = arith.constant 0 : index
      %c0_4 = arith.constant 0 : index
      %9 = vector.load %arg12[%c0, %c0_4] : memref<8x512xf32, #tpu.memory_space<vmem>>, vector<8x512xf32>
      %cst = arith.constant dense<0.000000e+00> : vector<512xf32>
      %10 = vector.multi_reduction <add>, %9, %cst [0] : vector<8x512xf32> to vector<512xf32>
      %11 = vector.shape_cast %10 : vector<512xf32> to vector<1x512xf32>
      %cst_5 = arith.constant 8.000000e+00 : f32
      %12 = vector.broadcast %cst_5 : f32 to vector<1x512xf32>
      %13 = arith.divf %11, %12 : vector<1x512xf32>
      %14 = vector.broadcast %13 : vector<1x512xf32> to vector<8x512xf32>
      %15 = arith.subf %9, %14 : vector<8x512xf32>
      %16 = arith.mulf %15, %15 : vector<8x512xf32>
      %cst_6 = arith.constant dense<0.000000e+00> : vector<512xf32>
      %17 = vector.multi_reduction <add>, %16, %cst_6 [0] : vector<8x512xf32> to vector<512xf32>
      %18 = vector.shape_cast %17 : vector<512xf32> to vector<1x512xf32>
      %cst_7 = arith.constant 8.000000e+00 : f32
      %19 = vector.broadcast %cst_7 : f32 to vector<1x512xf32>
      %20 = arith.divf %18, %19 : vector<1x512xf32>
      %21 = vector.broadcast %13 : vector<1x512xf32> to vector<8x512xf32>
      %22 = arith.subf %9, %21 : vector<8x512xf32>
      %cst_8 = arith.constant 9.99999974E-6 : f32
      %23 = vector.broadcast %cst_8 : f32 to vector<1x512xf32>
      %24 = arith.addf %20, %23 : vector<1x512xf32>
      %25 = math.rsqrt %24 : vector<1x512xf32>
      %26 = vector.broadcast %25 : vector<1x512xf32> to vector<8x512xf32>
      %27 = arith.mulf %22, %26 : vector<8x512xf32>
      %c0_9 = arith.constant 0 : index
      %c0_10 = arith.constant 0 : index
      %28 = vector.load %arg6[%c0_9, %c0_10] : memref<1x512xf32, #tpu.memory_space<vmem>>, vector<1x512xf32>
      %29 = vector.broadcast %28 : vector<1x512xf32> to vector<8x512xf32>
      %30 = arith.mulf %27, %29 : vector<8x512xf32>
      %c0_11 = arith.constant 0 : index
      %c0_12 = arith.constant 0 : index
      %31 = vector.load %arg7[%c0_11, %c0_12] : memref<1x512xf32, #tpu.memory_space<vmem>>, vector<1x512xf32>
      %32 = vector.broadcast %31 : vector<1x512xf32> to vector<8x512xf32>
      %33 = arith.addf %30, %32 : vector<8x512xf32>
      %cst_13 = arith.constant dense<0xFF800000> : vector<8xf32>
      %34 = vector.multi_reduction <maximumf>, %33, %cst_13 [1] : vector<8x512xf32> to vector<8xf32>
      %35 = vector.shape_cast %34 : vector<8xf32> to vector<8x1xf32>
      %36 = vector.broadcast %35 : vector<8x1xf32> to vector<8x512xf32>
      %37 = arith.subf %33, %36 : vector<8x512xf32>
      %38 = math.exp %37 : vector<8x512xf32>
      %cst_14 = arith.constant dense<0.000000e+00> : vector<8xf32>
      %39 = vector.multi_reduction <add>, %38, %cst_14 [1] : vector<8x512xf32> to vector<8xf32>
      %40 = vector.shape_cast %39 : vector<8xf32> to vector<8x1xf32>
      %41 = vector.broadcast %40 : vector<8x1xf32> to vector<8x512xf32>
      %42 = arith.divf %38, %41 : vector<8x512xf32>
      %43 = arith.truncf %42 : vector<8x512xf32> to vector<8x512xbf16>
      %c0_15 = arith.constant 0 : index
      %c0_16 = arith.constant 0 : index
      %44 = vector.load %arg8[%c0_15, %c0_16] : memref<512x128xi8, #tpu.memory_space<vmem>>, vector<512x128xi8>
      %45 = arith.sitofp %44 : vector<512x128xi8> to vector<512x128xbf16>
      %cst_17 = arith.constant dense<0.000000e+00> : vector<8x128xf32>
      %46 = tpu.matmul %43, %45, %cst_17 {dimension_numbers = #tpu.dot_dimension_numbers<[1], [0], [0], [1], [0, 0, 1, 1], [], []>} : vector<8x512xbf16>, vector<512x128xbf16>, vector<8x128xf32> -> vector<8x128xf32>
      %c0_18 = arith.constant 0 : index
      %c0_19 = arith.constant 0 : index
      %47 = vector.load %arg9[%c0_18, %c0_19] : memref<1x128xf32, #tpu.memory_space<vmem>>, vector<1x128xf32>
      %48 = vector.broadcast %47 : vector<1x128xf32> to vector<8x128xf32>
      %49 = arith.mulf %46, %48 : vector<8x128xf32>
      %c0_20 = arith.constant 0 : index
      %c0_21 = arith.constant 0 : index
      %50 = vector.load %arg10[%c0_20, %c0_21] : memref<1x128xf32, #tpu.memory_space<vmem>>, vector<1x128xf32>
      %51 = vector.broadcast %50 : vector<1x128xf32> to vector<8x128xf32>
      %52 = arith.addf %49, %51 : vector<8x128xf32>
      %c0_22 = arith.constant 0 : index
      %c0_23 = arith.constant 0 : index
      %53 = vector.load %arg11[%c0_22, %c0_23] : memref<8x128xf32, #tpu.memory_space<vmem>>, vector<8x128xf32>
      tpu.vector_store %arg11[%c0_22, %c0_23], %52 {strides = array<i32>} : memref<8x128xf32, #tpu.memory_space<vmem>>, vector<8x128xf32>,
    } else {
    }
    return
  }
  func.func @transform_0(%arg0: i32) -> (i32, i32) {
    %c0_i32 = arith.constant 0 : i32
    %c0_i32_0 = arith.constant 0 : i32
    %c0_i32_1 = arith.constant 0 : i32
    return %c0_i32, %c0_i32_0 : i32, i32
  }
  func.func @transform_1(%arg0: i32) -> (i32, i32) {
    %c0_i32 = arith.constant 0 : i32
    %c0_i32_0 = arith.constant 0 : i32
    %c0_i32_1 = arith.constant 0 : i32
    return %c0_i32, %c0_i32_0 : i32, i32
  }
  func.func @transform_2(%arg0: i32) -> (i32, i32, i32) {
    %c1_i32 = arith.constant 1 : i32
    %0 = arith.subi %arg0, %c1_i32 : i32
    %c0_i32 = arith.constant 0 : i32
    %1 = arith.maxsi %0, %c0_i32 : i32
    %c0_i32_0 = arith.constant 0 : i32
    %c0_i32_1 = arith.constant 0 : i32
    %c0_i32_2 = arith.constant 0 : i32
    return %1, %c0_i32_0, %c0_i32_1 : i32, i32, i32
  }
  func.func @transform_3(%arg0: i32) -> (i32, i32, i32) {
    %c1_i32 = arith.constant 1 : i32
    %0 = arith.subi %arg0, %c1_i32 : i32
    %c0_i32 = arith.constant 0 : i32
    %1 = arith.maxsi %0, %c0_i32 : i32
    %c0_i32_0 = arith.constant 0 : i32
    %c0_i32_1 = arith.constant 0 : i32
    %c0_i32_2 = arith.constant 0 : i32
    return %1, %c0_i32_0, %c0_i32_1 : i32, i32, i32
  }
  func.func @transform_4(%arg0: i32) -> (i32, i32, i32) {
    %c0_i32 = arith.constant 0 : i32
    %c0_i32_0 = arith.constant 0 : i32
    %c0_i32_1 = arith.constant 0 : i32
    return %arg0, %c0_i32, %c0_i32_0 : i32, i32, i32
  }
  func.func @transform_5(%arg0: i32) -> (i32, i32) {
    %c0_i32 = arith.constant 0 : i32
    %c0_i32_0 = arith.constant 0 : i32
    %c0_i32_1 = arith.constant 0 : i32
    return %c0_i32, %c0_i32_0 : i32, i32
  }
  func.func @transform_6(%arg0: i32) -> (i32, i32) {
    %c0_i32 = arith.constant 0 : i32
    %c0_i32_0 = arith.constant 0 : i32
    %c0_i32_1 = arith.constant 0 : i32
    return %c0_i32, %c0_i32_0 : i32, i32
  }
  func.func @transform_7(%arg0: i32) -> (i32, i32) {
    %c0_i32 = arith.constant 0 : i32
    %c0_i32_0 = arith.constant 0 : i32
    %c0_i32_1 = arith.constant 0 : i32
    return %c0_i32, %c0_i32_0 : i32, i32
  }
  func.func @transform_8(%arg0: i32) -> (i32, i32) {
    %c0_i32 = arith.constant 0 : i32
    %c0_i32_0 = arith.constant 0 : i32
    %c0_i32_1 = arith.constant 0 : i32
    return %c0_i32, %c0_i32_0 : i32, i32
  }
  func.func @transform_9(%arg0: i32) -> (i32, i32) {
    %c0_i32 = arith.constant 0 : i32
    %c0_i32_0 = arith.constant 0 : i32
    %c0_i32_1 = arith.constant 0 : i32
    return %c0_i32, %c0_i32_0 : i32, i32
  }
  func.func @transform_10(%arg0: i32) -> (i32, i32) {
    %c0_i32 = arith.constant 0 : i32
    %c0_i32_0 = arith.constant 0 : i32
    %c0_i32_1 = arith.constant 0 : i32
    return %c0_i32, %c0_i32_0 : i32, i32
  }
}

</mosaic_0001>

<llo_original>
// kernel: model_forward.1
$region0: #{model_forward.1}
  #allocation0 [shape = 'u32[]', space=smem, size = 0x4, offset = 0x4, fixed_abs, tag = 'smem constant byte address 0x4 - core index']
  #allocation1 [shape = 'u32[144,128]{1,0:T(1,128)}', space=vmem, size = 0x12000, scoped, tag = 'internal scratch']
  #allocation2 [shape = 'f32[8,512]{1,0:T(8,128)}', space=vmem, size = 0x4000, scoped, tag = 'scratch operand']
  %s0 = inlined_call_operand.hbm [shape: f32[8,10], index: 0, kind: input, shape index: {}]
  %s1 = inlined_call_operand.hbm [shape: bf16[10,1536], index: 1, kind: input, shape index: {}]
  %s2 = inlined_call_operand.hbm [shape: s8[3,512,1536], index: 2, kind: input, shape index: {}]
  %s3 = inlined_call_operand.hbm [shape: f32[3,1,1536], index: 3, kind: input, shape index: {}]
  %s4 = inlined_call_operand.hbm [shape: f32[4,1,1536], index: 4, kind: input, shape index: {}]
  %s5 = inlined_call_operand.hbm [shape: f32[1,512], index: 5, kind: input, shape index: {}]
  %s6 = inlined_call_operand.hbm [shape: f32[1,512], index: 6, kind: input, shape index: {}]
  %s7 = inlined_call_operand.hbm [shape: s8[512,128], index: 7, kind: input, shape index: {}]
  %s8 = inlined_call_operand.hbm [shape: f32[1,128], index: 8, kind: input, shape index: {}]
  %s9 = inlined_call_operand.hbm [shape: f32[1,128], index: 9, kind: input, shape index: {}]
  %s10 = inlined_call_operand.hbm [shape: f32[8,128], index: 10, kind: output, shape index: {}]
  %s11 = sld [smem:[#allocation0]]
  $region125: #{model_forward.1} parent=0
    _
  %s13 = ssub.s32 1, %s11
  %s14 = scalar_select 0, %s13, %s11
  $region1: #{model_forward.1} parent=0
    #allocation3 [shape = 'u8[4096]{0}', space=vmem, size = 0x1000, scoped, tag = 'input window, operand 0, single buffered']
    #allocation4 [shape = 's32[2]{0}', space=sflag, size = 0x8, scoped, tag = 'scoped memory for model_forward.1']
    #allocation5 [shape = 's32[2]{0}', space=sflag, size = 0x8, scoped, tag = 'scoped memory for model_forward.1']
    #allocation6 [shape = 'u8[49152]{0}', space=vmem, size = 0xc000, scoped, tag = 'input window, operand 1, single buffered']
    #allocation7 [shape = 's32[1]{0}', space=sflag, size = 0x4, scoped, tag = 'scoped memory for model_forward.1']
    #allocation8 [shape = 'u8[1572864]{0}', space=vmem, size = 0x180000, scoped, tag = 'input window, operand 2']
    #allocation9 [shape = 'u8[12288]{0}', space=vmem, size = 0x3000, scoped, tag = 'input window, operand 3']
    #allocation10 [shape = 'u8[12288]{0}', space=vmem, size = 0x3000, scoped, tag = 'input window, operand 4']
    #allocation11 [shape = 'u8[2048]{0}', space=vmem, size = 0x800, scoped, tag = 'input window, operand 5, single buffered']
    #allocation12 [shape = 'u8[2048]{0}', space=vmem, size = 0x800, scoped, tag = 'input window, operand 6, single buffered']
    #allocation13 [shape = 's32[1]{0}', space=sflag, size = 0x4, scoped, tag = 'scoped memory for model_forward.1']
    #allocation14 [shape = 'u8[65536]{0}', space=vmem, size = 0x10000, scoped, tag = 'input window, operand 7, single buffered']
    #allocation15 [shape = 'u8[512]{0}', space=vmem, size = 0x400, scoped, tag = 'input window, operand 8, single buffered']
    #allocation16 [shape = 's32[1]{0}', space=sflag, size = 0x4, scoped, tag = 'scoped memory for model_forward.1']
    #allocation17 [shape = 'u8[512]{0}', space=vmem, size = 0x400, scoped, tag = 'input window, operand 9, single buffered']
    #allocation18 [shape = 'u8[4096]{0}', space=vmem, size = 0x1000, scoped, tag = 'output window, operand 0, single buffered']
    %15 = vsyncpa [#allocation4], 0
    %16 = vsyncpa [#allocation7], 0
    %17 = vsyncpa [#allocation13], 0
    %18 = vsyncpa [#allocation16], 0
    %19 = vsyncpa [#allocation5], 0
    loop: start=0, step=1, limit=6
    $region2: #{model_forward.1} parent=1 // loop_pre_header
      _
    $region3: #{model_forward.1} parent=1 // loop_header
      %s21 = sphi 0, %s25
      %p22 = scmp.ge.s32.totalorder %s21, 6
      %s29 = sphi 0, %s29
      %s31 = sphi 0, %s29
      %s32 = sphi 0, %s31
      %s46 = sphi 0, %s32
      %s50 = sphi 0, %s50
      %s52 = sphi 0, %s50
      %s53 = sphi 0, %s52
      %s67 = sphi 0, %s53
      %s79 = sphi 0, %s81
      %s82 = sphi 0, %s79
      %s83 = sphi 0, %s82
      %s99 = sphi 0, %s83
      %s111 = sphi 0, %s113
      %s114 = sphi 0, %s111
      %s115 = sphi 0, %s114
      %s131 = sphi 0, %s115
      %s137 = sphi 0, %s139
      %s140 = sphi 0, %s137
      %s141 = sphi 0, %s140
      %s157 = sphi 0, %s141
      %s161 = sphi 0, %s161
      %s163 = sphi 0, %s161
      %s164 = sphi 0, %s163
      %s178 = sphi 0, %s164
      %s182 = sphi 0, %s182
      %s184 = sphi 0, %s182
      %s185 = sphi 0, %s184
      %s199 = sphi 0, %s185
      %s203 = sphi 0, %s203
      %s205 = sphi 0, %s203
      %s206 = sphi 0, %s205
      %s220 = sphi 0, %s206
      %s224 = sphi 0, %s224
      %s226 = sphi 0, %s224
      %s227 = sphi 0, %s226
      %s241 = sphi 0, %s227
      %s245 = sphi 0, %s245
      %s247 = sphi 0, %s245
      %s248 = sphi 0, %s247
      %s262 = sphi 0, %s248
      %s266 = sphi 0, %s266
      %s268 = sphi 0, %s266
      %s269 = sphi 0, %s268
      %s283 = sphi 0, %s269
    $region4: #{model_forward.1} parent=1 // loop_header_branch
      %24 = sbr.rel (%p22) target = $region8
    $region5: #{model_forward.1} parent=1 // loop_body
      %s26 = ssub.s32 %s21, 1
      %s27 = ssub.s32 %s21, 2
      %s28 = sadd.s32 %s21, 1
      %s30 = sadd.s32 %s29, 1
      %p33 = scmp.eq.s32.totalorder %s21, 3
      %p34 = scmp.ne.s32.totalorder %s29, %s31
      %p35 = scmp.eq.s32.totalorder %s21, 0
      %p36 = por %p34, %p35
      %p37 = scmp.ne.s32.totalorder %s29, %s31
      %p38 = scmp.eq.s32.totalorder %s26, 3
      %p39 = por %p37, %p38
      %p40 = scmp.ne.s32.totalorder %s31, %s32
      %p41 = scmp.eq.s32.totalorder %s26, 0
      %p42 = por %p40, %p41
      %p43 = scmp.ne.s32.totalorder %s31, %s32
      %p44 = scmp.eq.s32.totalorder %s27, 3
      %p45 = por %p43, %p44
      %p47 = scmp.ne.s32.totalorder %s32, %s46
      %p48 = scmp.eq.s32.totalorder %s27, 0
      %p49 = por %p47, %p48
      %s51 = sadd.s32 %s50, 1
      %p54 = scmp.eq.s32.totalorder %s21, 3
      %p55 = scmp.ne.s32.totalorder %s50, %s52
      %p56 = scmp.eq.s32.totalorder %s21, 0
      %p57 = por %p55, %p56
      %p58 = scmp.ne.s32.totalorder %s50, %s52
      %p59 = scmp.eq.s32.totalorder %s26, 3
      %p60 = por %p58, %p59
      %p61 = scmp.ne.s32.totalorder %s52, %s53
      %p62 = scmp.eq.s32.totalorder %s26, 0
      %p63 = por %p61, %p62
      %p64 = scmp.ne.s32.totalorder %s52, %s53
      %p65 = scmp.eq.s32.totalorder %s27, 3
      %p66 = por %p64, %p65
      %p68 = scmp.ne.s32.totalorder %s53, %s67
      %p69 = scmp.eq.s32.totalorder %s27, 0
      %p70 = por %p68, %p69
      %s71 = ssub.s32 %s21, 1
      %p72 = scmp.gt.s32.totalorder %s71, 0
      %s73 = scalar_select %p72, %s71, 0
      %s74 = ssub.s32 %s28, 1
      %p75 = scmp.gt.s32.totalorder %s74, 0
      %s76 = scalar_select %p75, %s74, 0
      %s77 = ssub.s32 %s73, %s76
      %p78 = scmp.eq.s32.totalorder %s77, 0
      %s80 = sadd.s32 %s79, 1
      %s81 = scalar_select %p78, %s79, %s80
      %p84 = pneg %p78
      %p85 = scmp.eq.s32.totalorder %s21, 3
      %p86 = por %p84, %p85
      %p87 = scmp.ne.s32.totalorder %s79, %s82
      %p88 = scmp.eq.s32.totalorder %s21, 0
      %p89 = por %p87, %p88
      %p90 = scmp.ne.s32.totalorder %s79, %s82
      %p91 = scmp.eq.s32.totalorder %s26, 3
      %p92 = por %p90, %p91
      %p93 = scmp.ne.s32.totalorder %s82, %s83
      %p94 = scmp.eq.s32.totalorder %s26, 0
      %p95 = por %p93, %p94
      %p96 = scmp.ne.s32.totalorder %s82, %s83
      %p97 = scmp.eq.s32.totalorder %s27, 3
      %p98 = por %p96, %p97
      %p100 = scmp.ne.s32.totalorder %s83, %s99
      %p101 = scmp.eq.s32.totalorder %s27, 0
      %p102 = por %p100, %p101
      %s103 = ssub.s32 %s21, 1
      %p104 = scmp.gt.s32.totalorder %s103, 0
      %s105 = scalar_select %p104, %s103, 0
      %s106 = ssub.s32 %s28, 1
      %p107 = scmp.gt.s32.totalorder %s106, 0
      %s108 = scalar_select %p107, %s106, 0
      %s109 = ssub.s32 %s105, %s108
      %p110 = scmp.eq.s32.totalorder %s109, 0
      %s112 = sadd.s32 %s111, 1
      %s113 = scalar_select %p110, %s111, %s112
      %p116 = pneg %p110
      %p117 = scmp.eq.s32.totalorder %s21, 3
      %p118 = por %p116, %p117
      %p119 = scmp.ne.s32.totalorder %s111, %s114
      %p120 = scmp.eq.s32.totalorder %s21, 0
      %p121 = por %p119, %p120
      %p122 = scmp.ne.s32.totalorder %s111, %s114
      %p123 = scmp.eq.s32.totalorder %s26, 3
      %p124 = por %p122, %p123
      %p125 = scmp.ne.s32.totalorder %s114, %s115
      %p126 = scmp.eq.s32.totalorder %s26, 0
      %p127 = por %p125, %p126
      %p128 = scmp.ne.s32.totalorder %s114, %s115
      %p129 = scmp.eq.s32.totalorder %s27, 3
      %p130 = por %p128, %p129
      %p132 = scmp.ne.s32.totalorder %s115, %s131
      %p133 = scmp.eq.s32.totalorder %s27, 0
      %p134 = por %p132, %p133
      %s135 = ssub.s32 %s21, %s28
      %p136 = scmp.eq.s32.totalorder %s135, 0
      %s138 = sadd.s32 %s137, 1
      %s139 = scalar_select %p136, %s137, %s138
      %p142 = pneg %p136
      %p143 = scmp.eq.s32.totalorder %s21, 3
      %p144 = por %p142, %p143
      %p145 = scmp.ne.s32.totalorder %s137, %s140
      %p146 = scmp.eq.s32.totalorder %s21, 0
      %p147 = por %p145, %p146
      %p148 = scmp.ne.s32.totalorder %s137, %s140
      %p149 = scmp.eq.s32.totalorder %s26, 3
      %p150 = por %p148, %p149
      %p151 = scmp.ne.s32.totalorder %s140, %s141
      %p152 = scmp.eq.s32.totalorder %s26, 0
      %p153 = por %p151, %p152
      %p154 = scmp.ne.s32.totalorder %s140, %s141
      %p155 = scmp.eq.s32.totalorder %s27, 3
      %p156 = por %p154, %p155
      %p158 = scmp.ne.s32.totalorder %s141, %s157
      %p159 = scmp.eq.s32.totalorder %s27, 0
      %p160 = por %p158, %p159
      %s162 = sadd.s32 %s161, 1
      %p165 = scmp.eq.s32.totalorder %s21, 3
      %p166 = scmp.ne.s32.totalorder %s161, %s163
      %p167 = scmp.eq.s32.totalorder %s21, 0
      %p168 = por %p166, %p167
      %p169 = scmp.ne.s32.totalorder %s161, %s163
      %p170 = scmp.eq.s32.totalorder %s26, 3
      %p171 = por %p169, %p170
      %p172 = scmp.ne.s32.totalorder %s163, %s164
      %p173 = scmp.eq.s32.totalorder %s26, 0
      %p174 = por %p172, %p173
      %p175 = scmp.ne.s32.totalorder %s163, %s164
      %p176 = scmp.eq.s32.totalorder %s27, 3
      %p177 = por %p175, %p176
      %p179 = scmp.ne.s32.totalorder %s164, %s178
      %p180 = scmp.eq.s32.totalorder %s27, 0
      %p181 = por %p179, %p180
      %s183 = sadd.s32 %s182, 1
      %p186 = scmp.eq.s32.totalorder %s21, 3
      %p187 = scmp.ne.s32.totalorder %s182, %s184
      %p188 = scmp.eq.s32.totalorder %s21, 0
      %p189 = por %p187, %p188
      %p190 = scmp.ne.s32.totalorder %s182, %s184
      %p191 = scmp.eq.s32.totalorder %s26, 3
      %p192 = por %p190, %p191
      %p193 = scmp.ne.s32.totalorder %s184, %s185
      %p194 = scmp.eq.s32.totalorder %s26, 0
      %p195 = por %p193, %p194
      %p196 = scmp.ne.s32.totalorder %s184, %s185
      %p197 = scmp.eq.s32.totalorder %s27, 3
      %p198 = por %p196, %p197
      %p200 = scmp.ne.s32.totalorder %s185, %s199
      %p201 = scmp.eq.s32.totalorder %s27, 0
      %p202 = por %p200, %p201
      %s204 = sadd.s32 %s203, 1
      %p207 = scmp.eq.s32.totalorder %s21, 3
      %p208 = scmp.ne.s32.totalorder %s203, %s205
      %p209 = scmp.eq.s32.totalorder %s21, 0
      %p210 = por %p208, %p209
      %p211 = scmp.ne.s32.totalorder %s203, %s205
      %p212 = scmp.eq.s32.totalorder %s26, 3
      %p213 = por %p211, %p212
      %p214 = scmp.ne.s32.totalorder %s205, %s206
      %p215 = scmp.eq.s32.totalorder %s26, 0
      %p216 = por %p214, %p215
      %p217 = scmp.ne.s32.totalorder %s205, %s206
      %p218 = scmp.eq.s32.totalorder %s27, 3
      %p219 = por %p217, %p218
      %p221 = scmp.ne.s32.totalorder %s206, %s220
      %p222 = scmp.eq.s32.totalorder %s27, 0
      %p223 = por %p221, %p222
      %s225 = sadd.s32 %s224, 1
      %p228 = scmp.eq.s32.totalorder %s21, 3
      %p229 = scmp.ne.s32.totalorder %s224, %s226
      %p230 = scmp.eq.s32.totalorder %s21, 0
      %p231 = por %p229, %p230
      %p232 = scmp.ne.s32.totalorder %s224, %s226
      %p233 = scmp.eq.s32.totalorder %s26, 3
      %p234 = por %p232, %p233
      %p235 = scmp.ne.s32.totalorder %s226, %s227
      %p236 = scmp.eq.s32.totalorder %s26, 0
      %p237 = por %p235, %p236
      %p238 = scmp.ne.s32.totalorder %s226, %s227
      %p239 = scmp.eq.s32.totalorder %s27, 3
      %p240 = por %p238, %p239
      %p242 = scmp.ne.s32.totalorder %s227, %s241
      %p243 = scmp.eq.s32.totalorder %s27, 0
      %p244 = por %p242, %p243
      %s246 = sadd.s32 %s245, 1
      %p249 = scmp.eq.s32.totalorder %s21, 3
      %p250 = scmp.ne.s32.totalorder %s245, %s247
      %p251 = scmp.eq.s32.totalorder %s21, 0
      %p252 = por %p250, %p251
      %p253 = scmp.ne.s32.totalorder %s245, %s247
      %p254 = scmp.eq.s32.totalorder %s26, 3
      %p255 = por %p253, %p254
      %p256 = scmp.ne.s32.totalorder %s247, %s248
      %p257 = scmp.eq.s32.totalorder %s26, 0
      %p258 = por %p256, %p257
      %p259 = scmp.ne.s32.totalorder %s247, %s248
      %p260 = scmp.eq.s32.totalorder %s27, 3
      %p261 = por %p259, %p260
      %p263 = scmp.ne.s32.totalorder %s248, %s262
      %p264 = scmp.eq.s32.totalorder %s27, 0
      %p265 = por %p263, %p264
      %s267 = sadd.s32 %s266, 1
      %p270 = scmp.eq.s32.totalorder %s21, 3
      %p271 = scmp.ne.s32.totalorder %s266, %s268
      %p272 = scmp.eq.s32.totalorder %s21, 0
      %p273 = por %p271, %p272
      %p274 = scmp.ne.s32.totalorder %s266, %s268
      %p275 = scmp.eq.s32.totalorder %s26, 3
      %p276 = por %p274, %p275
      %p277 = scmp.ne.s32.totalorder %s268, %s269
      %p278 = scmp.eq.s32.totalorder %s26, 0
      %p279 = por %p277, %p278
      %p280 = scmp.ne.s32.totalorder %s268, %s269
      %p281 = scmp.eq.s32.totalorder %s27, 3
      %p282 = por %p280, %p281
      %p284 = scmp.ne.s32.totalorder %s269, %s283
      %p285 = scmp.eq.s32.totalorder %s27, 0
      %p286 = por %p284, %p285
      %p287 = scmp.le.s32.totalorder 1, %s21
      %p288 = scmp.lt.s32.totalorder %s21, 5
      %p289 = pnand %p287, %p288
      %p290 = pneg %p289
      // Predicated region
      $region9: #{model_forward.1} parent=5 // pred_check
        _
      $region10: #{model_forward.1} parent=5 // pred_check_branch
        %292 = sbr.rel (%p289) target = $region12
      $region11: #{model_forward.1} parent=5 // pred_region
        %s293 = ssub.s32 %s21, 1
        // Predicated region
        $region13: #{model_forward.1} parent=11 // pred_check
          %p294 = pneg %p42
        $region14: #{model_forward.1} parent=11 // pred_check_branch
          %296 = sbr.rel (%p294) target = $region16
        $region15: #{model_forward.1} parent=11 // pred_region
          %s298 = ssub.s32 128, 128
          %299 = vsyncadd [#allocation4], %s298
          %s301 = sshll.u32 [#allocation3], 4
          %s302 = int_to_ptr.vmem [resolvable:$true] %s301
          %304 = dma.hbm_to_vmem [thread:$0]  %s0, 128, %s302, [#allocation4]
        $region16: #{model_forward.1} parent=11 // pred_fallthru
          _
        // Predicated region
        $region17: #{model_forward.1} parent=11 // pred_check
          %p305 = pneg %p63
        $region18: #{model_forward.1} parent=11 // pred_check_branch
          %307 = sbr.rel (%p305) target = $region20
        $region19: #{model_forward.1} parent=11 // pred_region
          %s309 = ssub.s32 1536, 1536
          %310 = vsyncadd [#allocation7], %s309
          %s311 = sshll.u32 [#allocation6], 4
          %s312 = int_to_ptr.vmem [resolvable:$true] %s311
          %317 = dma.hbm_to_vmem [thread:$0]  %s1, 1536, %s312, [#allocation7], 768, 768, 48
        $region20: #{model_forward.1} parent=11 // pred_fallthru
          _
        // Predicated region
        $region21: #{model_forward.1} parent=11 // pred_check
          %p318 = pneg %p174
        $region22: #{model_forward.1} parent=11 // pred_check_branch
          %320 = sbr.rel (%p318) target = $region24
        $region23: #{model_forward.1} parent=11 // pred_region
          %s322 = ssub.s32 64, 64
          %323 = vsyncadd [#allocation7], %s322
          %s325 = sshll.u32 [#allocation11], 4
          %s326 = int_to_ptr.vmem [resolvable:$true] %s325
          %328 = dma.hbm_to_vmem [thread:$0]  %s5, 64, %s326, [#allocation7]
        $region24: #{model_forward.1} parent=11 // pred_fallthru
          _
        // Predicated region
        $region25: #{model_forward.1} parent=11 // pred_check
          %p329 = pneg %p195
        $region26: #{model_forward.1} parent=11 // pred_check_branch
          %331 = sbr.rel (%p329) target = $region28
        $region27: #{model_forward.1} parent=11 // pred_region
          %s333 = ssub.s32 64, 64
          %334 = vsyncadd [#allocation13], %s333
          %s336 = sshll.u32 [#allocation12], 4
          %s337 = int_to_ptr.vmem [resolvable:$true] %s336
          %339 = dma.hbm_to_vmem [thread:$0]  %s6, 64, %s337, [#allocation13]
        $region28: #{model_forward.1} parent=11 // pred_fallthru
          _
        // Predicated region
        $region29: #{model_forward.1} parent=11 // pred_check
          %p340 = pneg %p216
        $region30: #{model_forward.1} parent=11 // pred_check_branch
          %342 = sbr.rel (%p340) target = $region32
        $region31: #{model_forward.1} parent=11 // pred_region
          %s344 = ssub.s32 2048, 2048
          %345 = vsyncadd [#allocation13], %s344
          %s346 = sshll.u32 [#allocation14], 4
          %s347 = int_to_ptr.vmem [resolvable:$true] %s346
          %352 = dma.hbm_to_vmem [thread:$0]  %s7, 2048, %s347, [#allocation13], 128, 128, 8
        $region32: #{model_forward.1} parent=11 // pred_fallthru
          _
        // Predicated region
        $region33: #{model_forward.1} parent=11 // pred_check
          %p353 = pneg %p237
        $region34: #{model_forward.1} parent=11 // pred_check_branch
          %355 = sbr.rel (%p353) target = $region36
        $region35: #{model_forward.1} parent=11 // pred_region
          %s357 = ssub.s32 16, 16
          %358 = vsyncadd [#allocation16], %s357
          %s360 = sshll.u32 [#allocation15], 4
          %s361 = int_to_ptr.vmem [resolvable:$true] %s360
          %363 = dma.hbm_to_vmem [thread:$0]  %s8, 16, %s361, [#allocation16]
        $region36: #{model_forward.1} parent=11 // pred_fallthru
          _
        // Predicated region
        $region37: #{model_forward.1} parent=11 // pred_check
          %p364 = pneg %p258
        $region38: #{model_forward.1} parent=11 // pred_check_branch
          %366 = sbr.rel (%p364) target = $region40
        $region39: #{model_forward.1} parent=11 // pred_region
          %s368 = ssub.s32 16, 16
          %369 = vsyncadd [#allocation16], %s368
          %s371 = sshll.u32 [#allocation17], 4
          %s372 = int_to_ptr.vmem [resolvable:$true] %s371
          %374 = dma.hbm_to_vmem [thread:$0]  %s9, 16, %s372, [#allocation16]
        $region40: #{model_forward.1} parent=11 // pred_fallthru
          _
      $region12: #{model_forward.1} parent=5 // pred_fallthru
        _
      %p375 = scmp.lt.s32.totalorder %s21, 4
      // Predicated region
      $region41: #{model_forward.1} parent=5 // pred_check
        %p376 = pneg %p375
      $region42: #{model_forward.1} parent=5 // pred_check_branch
        %378 = sbr.rel (%p376) target = $region44
      $region43: #{model_forward.1} parent=5 // pred_region
        // Predicated region
        $region45: #{model_forward.1} parent=43 // pred_check
          %p379 = pneg %p89
        $region46: #{model_forward.1} parent=43 // pred_check_branch
          %381 = sbr.rel (%p379) target = $region48
        $region47: #{model_forward.1} parent=43 // pred_region
          %s382 = sand.u32 %s21, 1
          %s383 = scalar_lea.sflag [#allocation4], %s382
          %s384 = sand.u32 %s79, 1
          %s385 = smul.addr %s384, 1536
          %s386 = scalar_lea.vmem [#allocation8], %s385
          %s387 = ssub.s32 %s21, 1
          %p388 = scmp.gt.s32.totalorder %s387, 0
          %s389 = scalar_select %p388, %s387, 0
          %s391 = ssub.s32 24576, 24576
          %392 = vsyncadd %s383, %s391
          %s393 = smul.addr %s389, 192
          %s394 = smul.addr %s393, 128
          %s395 = scalar_lea.hbm %s2, %s394
          %s396 = sshll.u32 %s386, 4
          %s397 = int_to_ptr.vmem [resolvable:$true] %s396
          %402 = dma.hbm_to_vmem [thread:$0]  %s395, 24576, %s397, %s383, 1536, 1536, 96
        $region48: #{model_forward.1} parent=43 // pred_fallthru
          _
        // Predicated region
        $region49: #{model_forward.1} parent=43 // pred_check
          %p403 = pneg %p121
        $region50: #{model_forward.1} parent=43 // pred_check_branch
          %405 = sbr.rel (%p403) target = $region52
        $region51: #{model_forward.1} parent=43 // pred_region
          %s406 = sand.u32 %s21, 1
          %s407 = scalar_lea.sflag [#allocation4], %s406
          %s408 = sand.u32 %s111, 1
          %s409 = smul.addr %s408, 12
          %s410 = scalar_lea.vmem [#allocation9], %s409
          %s411 = ssub.s32 %s21, 1
          %p412 = scmp.gt.s32.totalorder %s411, 0
          %s413 = scalar_select %p412, %s411, 0
          %s415 = ssub.s32 192, 192
          %416 = vsyncadd %s407, %s415
          %s417 = smul.addr %s413, 12
          %s418 = smul.addr %s417, 16
          %s419 = scalar_lea.hbm %s3, %s418
          %s421 = sshll.u32 %s410, 4
          %s422 = int_to_ptr.vmem [resolvable:$true] %s421
          %424 = dma.hbm_to_vmem [thread:$0]  %s419, 192, %s422, %s407
        $region52: #{model_forward.1} parent=43 // pred_fallthru
          _
        // Predicated region
        $region53: #{model_forward.1} parent=43 // pred_check
          %p425 = pneg %p147
        $region54: #{model_forward.1} parent=43 // pred_check_branch
          %427 = sbr.rel (%p425) target = $region56
        $region55: #{model_forward.1} parent=43 // pred_region
          %s428 = sand.u32 %s21, 1
          %s429 = scalar_lea.sflag [#allocation4], %s428
          %s430 = sand.u32 %s137, 1
          %s431 = smul.addr %s430, 12
          %s432 = scalar_lea.vmem [#allocation10], %s431
          %s434 = ssub.s32 192, 192
          %435 = vsyncadd %s429, %s434
          %s436 = smul.addr %s21, 12
          %s437 = smul.addr %s436, 16
          %s438 = scalar_lea.hbm %s4, %s437
          %s440 = sshll.u32 %s432, 4
          %s441 = int_to_ptr.vmem [resolvable:$true] %s440
          %443 = dma.hbm_to_vmem [thread:$0]  %s438, 192, %s441, %s429
        $region56: #{model_forward.1} parent=43 // pred_fallthru
          _
      $region44: #{model_forward.1} parent=5 // pred_fallthru
        _
      %p444 = scmp.le.s32.totalorder 1, %s21
      %p445 = scmp.lt.s32.totalorder %s21, 5
      %p446 = pnand %p444, %p445
      %p447 = pneg %p446
      // Predicated region
      $region57: #{model_forward.1} parent=5 // pred_check
        _
      $region58: #{model_forward.1} parent=5 // pred_check_branch
        %449 = sbr.rel (%p446) target = $region60
      $region59: #{model_forward.1} parent=5 // pred_region
        %s450 = ssub.s32 %s21, 1
        // Predicated region
        $region61: #{model_forward.1} parent=59 // pred_check
          %p451 = pneg %p42
        $region62: #{model_forward.1} parent=59 // pred_check_branch
          %453 = sbr.rel (%p451) target = $region64
        $region63: #{model_forward.1} parent=59 // pred_region
          %454 = dma.done [#allocation4], 128
        $region64: #{model_forward.1} parent=59 // pred_fallthru
          _
        // Predicated region
        $region65: #{model_forward.1} parent=59 // pred_check
          %p455 = pneg %p63
        $region66: #{model_forward.1} parent=59 // pred_check_branch
          %457 = sbr.rel (%p455) target = $region68
        $region67: #{model_forward.1} parent=59 // pred_region
          %458 = dma.done [#allocation7], 1536
        $region68: #{model_forward.1} parent=59 // pred_fallthru
          _
        %s459 = sand.u32 %s26, 1
        %s460 = scalar_lea.sflag [#allocation4], %s459
        %s461 = sand.u32 %s82, 1
        %s462 = smul.addr %s461, 1536
        %s463 = scalar_lea.vmem [#allocation8], %s462
        // Predicated region
        $region69: #{model_forward.1} parent=59 // pred_check
          %p464 = pneg %p95
        $region70: #{model_forward.1} parent=59 // pred_check_branch
          %466 = sbr.rel (%p464) target = $region72
        $region71: #{model_forward.1} parent=59 // pred_region
          %467 = dma.done %s460, 24576
        $region72: #{model_forward.1} parent=59 // pred_fallthru
          _
        %s468 = sand.u32 %s26, 1
        %s469 = scalar_lea.sflag [#allocation4], %s468
        %s470 = sand.u32 %s114, 1
        %s471 = smul.addr %s470, 12
        %s472 = scalar_lea.vmem [#allocation9], %s471
        // Predicated region
        $region73: #{model_forward.1} parent=59 // pred_check
          %p473 = pneg %p127
        $region74: #{model_forward.1} parent=59 // pred_check_branch
          %475 = sbr.rel (%p473) target = $region76
        $region75: #{model_forward.1} parent=59 // pred_region
          %476 = dma.done %s469, 192
        $region76: #{model_forward.1} parent=59 // pred_fallthru
          _
        %s477 = sand.u32 %s26, 1
        %s478 = scalar_lea.sflag [#allocation4], %s477
        %s479 = sand.u32 %s140, 1
        %s480 = smul.addr %s479, 12
        %s481 = scalar_lea.vmem [#allocation10], %s480
        // Predicated region
        $region77: #{model_forward.1} parent=59 // pred_check
          %p482 = pneg %p153
        $region78: #{model_forward.1} parent=59 // pred_check_branch
          %484 = sbr.rel (%p482) target = $region80
        $region79: #{model_forward.1} parent=59 // pred_region
          %485 = dma.done %s478, 192
        $region80: #{model_forward.1} parent=59 // pred_fallthru
          _
        // Predicated region
        $region81: #{model_forward.1} parent=59 // pred_check
          %p486 = pneg %p174
        $region82: #{model_forward.1} parent=59 // pred_check_branch
          %488 = sbr.rel (%p486) target = $region84
        $region83: #{model_forward.1} parent=59 // pred_region
          %489 = dma.done [#allocation7], 64
        $region84: #{model_forward.1} parent=59 // pred_fallthru
          _
        // Predicated region
        $region85: #{model_forward.1} parent=59 // pred_check
          %p490 = pneg %p195
        $region86: #{model_forward.1} parent=59 // pred_check_branch
          %492 = sbr.rel (%p490) target = $region88
        $region87: #{model_forward.1} parent=59 // pred_region
          %493 = dma.done [#allocation13], 64
        $region88: #{model_forward.1} parent=59 // pred_fallthru
          _
        // Predicated region
        $region89: #{model_forward.1} parent=59 // pred_check
          %p494 = pneg %p216
        $region90: #{model_forward.1} parent=59 // pred_check_branch
          %496 = sbr.rel (%p494) target = $region92
        $region91: #{model_forward.1} parent=59 // pred_region
          %497 = dma.done [#allocation13], 2048
        $region92: #{model_forward.1} parent=59 // pred_fallthru
          _
        // Predicated region
        $region93: #{model_forward.1} parent=59 // pred_check
          %p498 = pneg %p237
        $region94: #{model_forward.1} parent=59 // pred_check_branch
          %500 = sbr.rel (%p498) target = $region96
        $region95: #{model_forward.1} parent=59 // pred_region
          %501 = dma.done [#allocation16], 16
        $region96: #{model_forward.1} parent=59 // pred_fallthru
          _
        // Predicated region
        $region97: #{model_forward.1} parent=59 // pred_check
          %p502 = pneg %p258
        $region98: #{model_forward.1} parent=59 // pred_check_branch
          %504 = sbr.rel (%p502) target = $region100
        $region99: #{model_forward.1} parent=59 // pred_region
          %505 = dma.done [#allocation16], 16
        $region100: #{model_forward.1} parent=59 // pred_fallthru
          _
        %p506 = pneg %p42
        %p507 = pneg %p39
        %p508 = pneg %p63
        %p509 = pneg %p60
        %s510 = sand.u32 %s26, 1
        %s511 = scalar_lea.sflag [#allocation4], %s510
        %s512 = sand.u32 %s82, 1
        %s513 = smul.addr %s512, 1536
        %s514 = scalar_lea.vmem [#allocation8], %s513
        %p515 = pneg %p95
        %p516 = pneg %p92
        %s517 = sand.u32 %s26, 1
        %s518 = scalar_lea.sflag [#allocation4], %s517
        %s519 = sand.u32 %s114, 1
        %s520 = smul.addr %s519, 12
        %s521 = scalar_lea.vmem [#allocation9], %s520
        %p522 = pneg %p127
        %p523 = pneg %p124
        %s524 = sand.u32 %s26, 1
        %s525 = scalar_lea.sflag [#allocation4], %s524
        %s526 = sand.u32 %s140, 1
        %s527 = smul.addr %s526, 12
        %s528 = scalar_lea.vmem [#allocation10], %s527
        %p529 = pneg %p153
        %p530 = pneg %p150
        %p531 = pneg %p174
        %p532 = pneg %p171
        %p533 = pneg %p195
        %p534 = pneg %p192
        %p535 = pneg %p216
        %p536 = pneg %p213
        %p537 = pneg %p237
        %p538 = pneg %p234
        %p539 = pneg %p258
        %p540 = pneg %p255
        %p541 = pneg %p279
        %p542 = pneg %p276
        %s543 = ssub.s32 %s26, 1
        %p544 = scmp.gt.s32.totalorder %s543, 0
        %s545 = scalar_select %p544, %s543, 0
        %s546 = ssub.s32 %s26, 1
        %p547 = scmp.gt.s32.totalorder %s546, 0
        %s548 = scalar_select %p547, %s546, 0
        %p550 = scmp.eq.s32.totalorder %s26, 0
        // Predicated region
        $region101: #{model_forward.1} parent=59 // pred_check
          %p551 = pneg %p550
        $region102: #{model_forward.1} parent=59 // pred_check_branch
          %553 = sbr.rel (%p551) target = $region104
        $region103: #{model_forward.1} parent=59 // pred_region
          %v554 = vld [vmem:[#allocation3] sm:$0xff]
          %v555 = vpack.c.bf16 %v554, %v554
          %v556 = vld [vmem:[#allocation6] sm:$0xff]
          %v557 = vld [vmem:[#allocation6 + $0x8] sm:$0xff]
          %v558 = vld [vmem:[#allocation6 + $0x10] sm:$0xff]
          %v559 = vld [vmem:[#allocation6 + $0x18] sm:$0xff]
          %v560 = vld [vmem:[#allocation6 + $0x20] sm:$0xff]
          %v561 = vld [vmem:[#allocation6 + $0x28] sm:$0xff]
          %v562 = vld [vmem:[#allocation6 + $0x30] sm:$0x11]
          %v563 = vld [vmem:[#allocation6 + $0x38] sm:$0x11]
          %v564 = vld [vmem:[#allocation6 + $0x40] sm:$0x11]
          %v565 = vld [vmem:[#allocation6 + $0x48] sm:$0x11]
          %v566 = vld [vmem:[#allocation6 + $0x50] sm:$0x11]
          %v567 = vld [vmem:[#allocation6 + $0x58] sm:$0x11]
          %v568 = vld [vmem:[%s481] sm:$0xff]
          %v569 = vld [vmem:[%s481 + $0x8] sm:$0xf]
          %v572 = vlaneseq
          %v573 = vshrl.u32 %v572, 7
          %v574 = vsub.s32 0, %v573
          %v575 = vrot.slane %v568, %v574
          %v576 = vlaneseq
          %v577 = vshrl.u32 %v576, 7
          %v578 = vsub.s32 1, %v577
          %v579 = vrot.slane %v568, %v578
          %v580 = vlaneseq
          %v581 = vshrl.u32 %v580, 7
          %v582 = vsub.s32 2, %v581
          %v583 = vrot.slane %v568, %v582
          %v584 = vlaneseq
          %v585 = vshrl.u32 %v584, 7
          %v586 = vsub.s32 3, %v585
          %v587 = vrot.slane %v568, %v586
          %v588 = vlaneseq
          %v589 = vshrl.u32 %v588, 7
          %v590 = vsub.s32 4, %v589
          %v591 = vrot.slane %v568, %v590
          %v592 = vlaneseq
          %v593 = vshrl.u32 %v592, 7
          %v594 = vsub.s32 5, %v593
          %v595 = vrot.slane %v568, %v594
          %v596 = vlaneseq
          %v597 = vshrl.u32 %v596, 7
          %v598 = vsub.s32 6, %v597
          %v599 = vrot.slane %v568, %v598
          %v600 = vlaneseq
          %v601 = vshrl.u32 %v600, 7
          %v602 = vsub.s32 7, %v601
          %v603 = vrot.slane %v568, %v602
          %v604 = vlaneseq
          %v605 = vshrl.u32 %v604, 7
          %v606 = vsub.s32 0, %v605
          %v607 = vrot.slane %v569, %v606
          %v608 = vlaneseq
          %v609 = vshrl.u32 %v608, 7
          %v610 = vsub.s32 1, %v609
          %v611 = vrot.slane %v569, %v610
          %v612 = vlaneseq
          %v613 = vshrl.u32 %v612, 7
          %v614 = vsub.s32 2, %v613
          %v615 = vrot.slane %v569, %v614
          %v616 = vlaneseq
          %v617 = vshrl.u32 %v616, 7
          %v618 = vsub.s32 3, %v617
          %v619 = vrot.slane %v569, %v618
          %v644 = vunpack.c.l.b16 %v556
          %v645 = vunpack.c.h.b16 %v556
          %v646 = vunpack.c.l.b16 %v557
          %v647 = vunpack.c.h.b16 %v557
          %v648 = vunpack.c.l.b16 %v558
          %v649 = vunpack.c.h.b16 %v558
          %v650 = vunpack.c.l.b16 %v559
          %v651 = vunpack.c.h.b16 %v559
          %v652 = vunpack.c.l.b16 %v560
          %v653 = vunpack.c.h.b16 %v560
          %v654 = vunpack.c.l.b16 %v561
          %v655 = vunpack.c.h.b16 %v561
          %v656 = vunpack.c.l.b16 %v562
          %v657 = vunpack.c.h.b16 %v562
          %v658 = vunpack.c.l.b16 %v563
          %v659 = vunpack.c.h.b16 %v563
          %v660 = vunpack.c.l.b16 %v564
          %v661 = vunpack.c.h.b16 %v564
          %v662 = vunpack.c.l.b16 %v565
          %v663 = vunpack.c.h.b16 %v565
          %v664 = vunpack.c.l.b16 %v566
          %v665 = vunpack.c.h.b16 %v566
          %v666 = vunpack.c.l.b16 %v567
          %v667 = vunpack.c.h.b16 %v567
          %v668 = vpack.c.b16 %v656, %v644
          %v669 = vpack.c.b16 %v657, %v645
          %v670 = vpack.c.b16 %v658, %v646
          %v671 = vpack.c.b16 %v659, %v647
          %v672 = vpack.c.b16 %v660, %v648
          %v673 = vpack.c.b16 %v661, %v649
          %v674 = vpack.c.b16 %v662, %v650
          %v675 = vpack.c.b16 %v663, %v651
          %v676 = vpack.c.b16 %v664, %v652
          %v677 = vpack.c.b16 %v665, %v653
          %v678 = vpack.c.b16 %v666, %v654
          %v679 = vpack.c.b16 %v667, %v655
          %vm680 = vcmask 80896
          %v682 = vsel %vm680, %v555, 0
          %vm684 = vcmask 1044480
          %v686 = vsel %vm684, %v668, 0
          %v689 = vsel %vm684, %v669, 0
          %v692 = vsel %vm684, %v670, 0
          %v695 = vsel %vm684, %v671, 0
          %v698 = vsel %vm684, %v672, 0
          %v701 = vsel %vm684, %v673, 0
          %v704 = vsel %vm684, %v674, 0
          %v707 = vsel %vm684, %v675, 0
          %v710 = vsel %vm684, %v676, 0
          %v713 = vsel %vm684, %v677, 0
          %v716 = vsel %vm684, %v678, 0
          %v719 = vsel %vm684, %v679, 0
          %721 = vmatprep.subr.bf16.mxu0 %v689
          %722 = vmatpush1.bf16.msra.mxu0 %v686
          %723 = vmatprep.subr.bf16.mxu0 0
          %724 = vmatpush1.bf16.msra.mxu0 0
          %725 = vmatprep.subr.bf16.mxu0 0
          %726 = vmatpush1.bf16.msra.mxu0 0
          %727 = vmatprep.subr.bf16.mxu0 0
          %728 = vmatpush1.bf16.msra.mxu0 0
          %729 = vmatprep.subr.bf16.mxu0 0
          %730 = vmatpush1.bf16.msra.mxu0 0
          %731 = vmatprep.subr.bf16.mxu0 0
          %732 = vmatpush1.bf16.msra.mxu0 0
          %733 = vmatprep.subr.bf16.mxu0 0
          %734 = vmatpush1.bf16.msra.mxu0 0
          %735 = vmatprep.subr.bf16.mxu0 0
          %736 = vmatpush1.bf16.msra.mxu0 0
          %737 = vmatprep.subr.bf16.mxu0 0
          %738 = vmatpush1.bf16.msra.mxu0 0
          %739 = vmatprep.subr.bf16.mxu0 0
          %740 = vmatpush1.bf16.msra.mxu0 0
          %741 = vmatprep.subr.bf16.mxu0 0
          %742 = vmatpush1.bf16.msra.mxu0 0
          %743 = vmatprep.subr.bf16.mxu0 0
          %744 = vmatpush1.bf16.msra.mxu0 0
          %745 = vmatprep.subr.bf16.mxu0 0
          %746 = vmatpush1.bf16.msra.mxu0 0
          %747 = vmatprep.subr.bf16.mxu0 0
          %748 = vmatpush1.bf16.msra.mxu0 0
          %749 = vmatprep.subr.bf16.mxu0 0
          %750 = vmatpush1.bf16.msra.mxu0 0
          %751 = vmatprep.subr.bf16.mxu0 0
          %752 = vmatpush1.bf16.msra.mxu0 0
          %753 = vmatprep.mubr.bf16.mxu0 0
          %754 = vmatmul.mubr.bf16.gmra.mrb[0].mxu0 %v682
          %v755 = vpop.f32.mrb[0].mxu0
          %v756 = vadd.f32 %v575, %v755
          %v757 = vpop.f32.mrb[0].mxu0
          %v758 = vadd.f32 %v579, %v757
          %v759 = vpop.f32.mrb[0].mxu0
          %v760 = vpop.f32.mrb[0].mxu0
          %761 = vdwg.mxu0
          %762 = vmatprep.subr.bf16.mxu0 %v695
          %763 = vmatpush1.bf16.msra.mxu0 %v692
          %764 = vmatprep.subr.bf16.mxu0 0
          %765 = vmatpush1.bf16.msra.mxu0 0
          %766 = vmatprep.subr.bf16.mxu0 0
          %767 = vmatpush1.bf16.msra.mxu0 0
          %768 = vmatprep.subr.bf16.mxu0 0
          %769 = vmatpush1.bf16.msra.mxu0 0
          %770 = vmatprep.subr.bf16.mxu0 0
          %771 = vmatpush1.bf16.msra.mxu0 0
          %772 = vmatprep.subr.bf16.mxu0 0
          %773 = vmatpush1.bf16.msra.mxu0 0
          %774 = vmatprep.subr.bf16.mxu0 0
          %775 = vmatpush1.bf16.msra.mxu0 0
          %776 = vmatprep.subr.bf16.mxu0 0
          %777 = vmatpush1.bf16.msra.mxu0 0
          %778 = vmatprep.subr.bf16.mxu0 0
          %779 = vmatpush1.bf16.msra.mxu0 0
          %780 = vmatprep.subr.bf16.mxu0 0
          %781 = vmatpush1.bf16.msra.mxu0 0
          %782 = vmatprep.subr.bf16.mxu0 0
          %783 = vmatpush1.bf16.msra.mxu0 0
          %784 = vmatprep.subr.bf16.mxu0 0
          %785 = vmatpush1.bf16.msra.mxu0 0
          %786 = vmatprep.subr.bf16.mxu0 0
          %787 = vmatpush1.bf16.msra.mxu0 0
          %788 = vmatprep.subr.bf16.mxu0 0
          %789 = vmatpush1.bf16.msra.mxu0 0
          %790 = vmatprep.subr.bf16.mxu0 0
          %791 = vmatpush1.bf16.msra.mxu0 0
          %792 = vmatprep.subr.bf16.mxu0 0
          %793 = vmatpush1.bf16.msra.mxu0 0
          %794 = vmatprep.mubr.bf16.mxu0 0
          %795 = vmatmul.mubr.bf16.gmra.mrb[0].mxu0 %v682
          %v796 = vpop.f32.mrb[0].mxu0
          %v797 = vadd.f32 %v583, %v796
          %v798 = vpop.f32.mrb[0].mxu0
          %v799 = vadd.f32 %v587, %v798
          %v800 = vpop.f32.mrb[0].mxu0
          %v801 = vpop.f32.mrb[0].mxu0
          %802 = vdwg.mxu0
          %803 = vmatprep.subr.bf16.mxu0 %v701
          %804 = vmatpush1.bf16.msra.mxu0 %v698
          %805 = vmatprep.subr.bf16.mxu0 0
          %806 = vmatpush1.bf16.msra.mxu0 0
          %807 = vmatprep.subr.bf16.mxu0 0
          %808 = vmatpush1.bf16.msra.mxu0 0
          %809 = vmatprep.subr.bf16.mxu0 0
          %810 = vmatpush1.bf16.msra.mxu0 0
          %811 = vmatprep.subr.bf16.mxu0 0
          %812 = vmatpush1.bf16.msra.mxu0 0
          %813 = vmatprep.subr.bf16.mxu0 0
          %814 = vmatpush1.bf16.msra.mxu0 0
          %815 = vmatprep.subr.bf16.mxu0 0
          %816 = vmatpush1.bf16.msra.mxu0 0
          %817 = vmatprep.subr.bf16.mxu0 0
          %818 = vmatpush1.bf16.msra.mxu0 0
          %819 = vmatprep.subr.bf16.mxu0 0
          %820 = vmatpush1.bf16.msra.mxu0 0
          %821 = vmatprep.subr.bf16.mxu0 0
          %822 = vmatpush1.bf16.msra.mxu0 0
          %823 = vmatprep.subr.bf16.mxu0 0
          %824 = vmatpush1.bf16.msra.mxu0 0
          %825 = vmatprep.subr.bf16.mxu0 0
          %826 = vmatpush1.bf16.msra.mxu0 0
          %827 = vmatprep.subr.bf16.mxu0 0
          %828 = vmatpush1.bf16.msra.mxu0 0
          %829 = vmatprep.subr.bf16.mxu0 0
          %830 = vmatpush1.bf16.msra.mxu0 0
          %831 = vmatprep.subr.bf16.mxu0 0
          %832 = vmatpush1.bf16.msra.mxu0 0
          %833 = vmatprep.subr.bf16.mxu0 0
          %834 = vmatpush1.bf16.msra.mxu0 0
          %835 = vmatprep.mubr.bf16.mxu0 0
          %836 = vmatmul.mubr.bf16.gmra.mrb[0].mxu0 %v682
          %v837 = vpop.f32.mrb[0].mxu0
          %v838 = vadd.f32 %v591, %v837
          %v839 = vpop.f32.mrb[0].mxu0
          %v840 = vadd.f32 %v595, %v839
          %v841 = vpop.f32.mrb[0].mxu0
          %v842 = vpop.f32.mrb[0].mxu0
          %843 = vdwg.mxu0
          %844 = vmatprep.subr.bf16.mxu0 %v707
          %845 = vmatpush1.bf16.msra.mxu0 %v704
          %846 = vmatprep.subr.bf16.mxu0 0
          %847 = vmatpush1.bf16.msra.mxu0 0
          %848 = vmatprep.subr.bf16.mxu0 0
          %849 = vmatpush1.bf16.msra.mxu0 0
          %850 = vmatprep.subr.bf16.mxu0 0
          %851 = vmatpush1.bf16.msra.mxu0 0
          %852 = vmatprep.subr.bf16.mxu0 0
          %853 = vmatpush1.bf16.msra.mxu0 0
          %854 = vmatprep.subr.bf16.mxu0 0
          %855 = vmatpush1.bf16.msra.mxu0 0
          %856 = vmatprep.subr.bf16.mxu0 0
          %857 = vmatpush1.bf16.msra.mxu0 0
          %858 = vmatprep.subr.bf16.mxu0 0
          %859 = vmatpush1.bf16.msra.mxu0 0
          %860 = vmatprep.subr.bf16.mxu0 0
          %861 = vmatpush1.bf16.msra.mxu0 0
          %862 = vmatprep.subr.bf16.mxu0 0
          %863 = vmatpush1.bf16.msra.mxu0 0
          %864 = vmatprep.subr.bf16.mxu0 0
          %865 = vmatpush1.bf16.msra.mxu0 0
          %866 = vmatprep.subr.bf16.mxu0 0
          %867 = vmatpush1.bf16.msra.mxu0 0
          %868 = vmatprep.subr.bf16.mxu0 0
          %869 = vmatpush1.bf16.msra.mxu0 0
          %870 = vmatprep.subr.bf16.mxu0 0
          %871 = vmatpush1.bf16.msra.mxu0 0
          %872 = vmatprep.subr.bf16.mxu0 0
          %873 = vmatpush1.bf16.msra.mxu0 0
          %874 = vmatprep.subr.bf16.mxu0 0
          %875 = vmatpush1.bf16.msra.mxu0 0
          %876 = vmatprep.mubr.bf16.mxu0 0
          %877 = vmatmul.mubr.bf16.gmra.mrb[0].mxu0 %v682
          %v878 = vpop.f32.mrb[0].mxu0
          %v879 = vadd.f32 %v599, %v878
          %v880 = vpop.f32.mrb[0].mxu0
          %v881 = vadd.f32 %v603, %v880
          %v882 = vpop.f32.mrb[0].mxu0
          %v883 = vpop.f32.mrb[0].mxu0
          %884 = vdwg.mxu0
          %885 = vmatprep.subr.bf16.mxu0 %v713
          %886 = vmatpush1.bf16.msra.mxu0 %v710
          %887 = vmatprep.subr.bf16.mxu0 0
          %888 = vmatpush1.bf16.msra.mxu0 0
          %889 = vmatprep.subr.bf16.mxu0 0
          %890 = vmatpush1.bf16.msra.mxu0 0
          %891 = vmatprep.subr.bf16.mxu0 0
          %892 = vmatpush1.bf16.msra.mxu0 0
          %893 = vmatprep.subr.bf16.mxu0 0
          %894 = vmatpush1.bf16.msra.mxu0 0
          %895 = vmatprep.subr.bf16.mxu0 0
          %896 = vmatpush1.bf16.msra.mxu0 0
          %897 = vmatprep.subr.bf16.mxu0 0
          %898 = vmatpush1.bf16.msra.mxu0 0
          %899 = vmatprep.subr.bf16.mxu0 0
          %900 = vmatpush1.bf16.msra.mxu0 0
          %901 = vmatprep.subr.bf16.mxu0 0
          %902 = vmatpush1.bf16.msra.mxu0 0
          %903 = vmatprep.subr.bf16.mxu0 0
          %904 = vmatpush1.bf16.msra.mxu0 0
          %905 = vmatprep.subr.bf16.mxu0 0
          %906 = vmatpush1.bf16.msra.mxu0 0
          %907 = vmatprep.subr.bf16.mxu0 0
          %908 = vmatpush1.bf16.msra.mxu0 0
          %909 = vmatprep.subr.bf16.mxu0 0
          %910 = vmatpush1.bf16.msra.mxu0 0
          %911 = vmatprep.subr.bf16.mxu0 0
          %912 = vmatpush1.bf16.msra.mxu0 0
          %913 = vmatprep.subr.bf16.mxu0 0
          %914 = vmatpush1.bf16.msra.mxu0 0
          %915 = vmatprep.subr.bf16.mxu0 0
          %916 = vmatpush1.bf16.msra.mxu0 0
          %917 = vmatprep.mubr.bf16.mxu0 0
          %918 = vmatmul.mubr.bf16.gmra.mrb[0].mxu0 %v682
          %v919 = vpop.f32.mrb[0].mxu0
          %v920 = vadd.f32 %v607, %v919
          %v921 = vpop.f32.mrb[0].mxu0
          %v922 = vadd.f32 %v611, %v921
          %v923 = vpop.f32.mrb[0].mxu0
          %v924 = vpop.f32.mrb[0].mxu0
          %925 = vdwg.mxu0
          %926 = vmatprep.subr.bf16.mxu0 %v719
          %927 = vmatpush1.bf16.msra.mxu0 %v716
          %928 = vmatprep.subr.bf16.mxu0 0
          %929 = vmatpush1.bf16.msra.mxu0 0
          %930 = vmatprep.subr.bf16.mxu0 0
          %931 = vmatpush1.bf16.msra.mxu0 0
          %932 = vmatprep.subr.bf16.mxu0 0
          %933 = vmatpush1.bf16.msra.mxu0 0
          %934 = vmatprep.subr.bf16.mxu0 0
          %935 = vmatpush1.bf16.msra.mxu0 0
          %936 = vmatprep.subr.bf16.mxu0 0
          %937 = vmatpush1.bf16.msra.mxu0 0
          %938 = vmatprep.subr.bf16.mxu0 0
          %939 = vmatpush1.bf16.msra.mxu0 0
          %940 = vmatprep.subr.bf16.mxu0 0
          %941 = vmatpush1.bf16.msra.mxu0 0
          %942 = vmatprep.subr.bf16.mxu0 0
          %943 = vmatpush1.bf16.msra.mxu0 0
          %944 = vmatprep.subr.bf16.mxu0 0
          %945 = vmatpush1.bf16.msra.mxu0 0
          %946 = vmatprep.subr.bf16.mxu0 0
          %947 = vmatpush1.bf16.msra.mxu0 0
          %948 = vmatprep.subr.bf16.mxu0 0
          %949 = vmatpush1.bf16.msra.mxu0 0
          %950 = vmatprep.subr.bf16.mxu0 0
          %951 = vmatpush1.bf16.msra.mxu0 0
          %952 = vmatprep.subr.bf16.mxu0 0
          %953 = vmatpush1.bf16.msra.mxu0 0
          %954 = vmatprep.subr.bf16.mxu0 0
          %955 = vmatpush1.bf16.msra.mxu0 0
          %956 = vmatprep.subr.bf16.mxu0 0
          %957 = vmatpush1.bf16.msra.mxu0 0
          %958 = vmatprep.mubr.bf16.mxu0 0
          %959 = vmatmul.mubr.bf16.gmra.mrb[0].mxu0 %v682
          %v960 = vpop.f32.mrb[0].mxu0
          %v961 = vadd.f32 %v615, %v960
          %v962 = vpop.f32.mrb[0].mxu0
          %v963 = vadd.f32 %v619, %v962
          %v964 = vpop.f32.mrb[0].mxu0
          %v965 = vpop.f32.mrb[0].mxu0
          %966 = vdwg.mxu0
          %v967 = vxor.u32 %v756, 2147483648
          %v968 = vxor.u32 %v758, 2147483648
          %v969 = vxor.u32 %v797, 2147483648
          %v970 = vxor.u32 %v799, 2147483648
          %v971 = vmul.f32 %v967, 1.442695
          %v972 = vpow.pop %v971
          %v973 = vmul.f32 %v968, 1.442695
          %v974 = vpow.pop %v973
          %v975 = vmul.f32 %v969, 1.442695
          %v976 = vpow.pop %v975
          %v977 = vmul.f32 %v970, 1.442695
          %v978 = vpow.pop %v977
          %v979 = vadd.f32 %v972, 1.0
          %v980 = vadd.f32 %v974, 1.0
          %v981 = vadd.f32 %v976, 1.0
          %v982 = vadd.f32 %v978, 1.0
          %v983 = vrcp.pop %v979
          %v984 = vmul.f32 1.0, %v983
          %v985 = vrcp.pop %v980
          %v986 = vmul.f32 1.0, %v985
          %v987 = vrcp.pop %v981
          %v988 = vmul.f32 1.0, %v987
          %v989 = vrcp.pop %v982
          %v990 = vmul.f32 1.0, %v989
          %v991 = vtanh.pop %v838
          %v992 = vtanh.pop %v840
          %v993 = vtanh.pop %v879
          %v994 = vtanh.pop %v881
          %v995 = vxor.u32 %v920, 2147483648
          %v996 = vxor.u32 %v922, 2147483648
          %v997 = vxor.u32 %v961, 2147483648
          %v998 = vxor.u32 %v963, 2147483648
          %v999 = vmul.f32 %v995, 1.442695
          %v1000 = vpow.pop %v999
          %v1001 = vmul.f32 %v996, 1.442695
          %v1002 = vpow.pop %v1001
          %v1003 = vmul.f32 %v997, 1.442695
          %v1004 = vpow.pop %v1003
          %v1005 = vmul.f32 %v998, 1.442695
          %v1006 = vpow.pop %v1005
          %v1007 = vadd.f32 %v1000, 1.0
          %v1008 = vadd.f32 %v1002, 1.0
          %v1009 = vadd.f32 %v1004, 1.0
          %v1010 = vadd.f32 %v1006, 1.0
          %v1011 = vrcp.pop %v1007
          %v1012 = vmul.f32 1.0, %v1011
          %v1013 = vrcp.pop %v1008
          %v1014 = vmul.f32 1.0, %v1013
          %v1015 = vrcp.pop %v1009
          %v1016 = vmul.f32 1.0, %v1015
          %v1017 = vrcp.pop %v1010
          %v1018 = vmul.f32 1.0, %v1017
          %v1019 = vmul.f32 %v984, %v991
          %v1020 = vmul.f32 %v986, %v992
          %v1021 = vmul.f32 %v988, %v993
          %v1022 = vmul.f32 %v990, %v994
          %v1023 = vtanh.pop %v1019
          %v1024 = vtanh.pop %v1020
          %v1025 = vtanh.pop %v1021
          %v1026 = vtanh.pop %v1022
          %v1027 = vmul.f32 %v1012, %v1023
          %v1028 = vmul.f32 %v1014, %v1024
          %v1029 = vmul.f32 %v1016, %v1025
          %v1030 = vmul.f32 %v1018, %v1026
          %1031 = vst [vmem:[#allocation2] sm:$0xff] %v1027
          %1032 = vst [vmem:[#allocation2 + $0x8] sm:$0xff] %v1028
          %1033 = vst [vmem:[#allocation2 + $0x10] sm:$0xff] %v1029
          %1034 = vst [vmem:[#allocation2 + $0x18] sm:$0xff] %v1030
        $region104: #{model_forward.1} parent=59 // pred_fallthru
          _
        %p1035 = scmp.gt.s32.totalorder %s26, 0
        // Predicated region
        $region105: #{model_forward.1} parent=59 // pred_check
          %p1036 = pneg %p1035
        $region106: #{model_forward.1} parent=59 // pred_check_branch
          %1038 = sbr.rel (%p1036) target = $region108
        $region107: #{model_forward.1} parent=59 // pred_region
          %v1039 = vld [vmem:[%s463] sm:$0xff]
          %v1040 = vld [vmem:[%s463 + $0x8] sm:$0xff]
          %v1041 = vld [vmem:[%s463 + $0x10] sm:$0xff]
          %v1042 = vld [vmem:[%s463 + $0x18] sm:$0xff]
          %v1043 = vld [vmem:[%s463 + $0x20] sm:$0xff]
          %v1044 = vld [vmem:[%s463 + $0x28] sm:$0xff]
          %v1045 = vld [vmem:[%s463 + $0x30] sm:$0xff]
          %v1046 = vld [vmem:[%s463 + $0x38] sm:$0xff]
          %v1047 = vld [vmem:[%s463 + $0x40] sm:$0xff]
          %v1048 = vld [vmem:[%s463 + $0x48] sm:$0xff]
          %v1049 = vld [vmem:[%s463 + $0x50] sm:$0xff]
          %v1050 = vld [vmem:[%s463 + $0x58] sm:$0xff]
          %v1051 = vld [vmem:[%s463 + $0x60] sm:$0xff]
          %v1052 = vld [vmem:[%s463 + $0x68] sm:$0xff]
          %v1053 = vld [vmem:[%s463 + $0x70] sm:$0xff]
          %v1054 = vld [vmem:[%s463 + $0x78] sm:$0xff]
          %v1055 = vld [vmem:[%s463 + $0x80] sm:$0xff]
          %v1056 = vld [vmem:[%s463 + $0x88] sm:$0xff]
          %v1057 = vld [vmem:[%s463 + $0x90] sm:$0xff]
          %v1058 = vld [vmem:[%s463 + $0x98] sm:$0xff]
          %v1059 = vld [vmem:[%s463 + $0xa0] sm:$0xff]
          %v1060 = vld [vmem:[%s463 + $0xa8] sm:$0xff]
          %v1061 = vld [vmem:[%s463 + $0xb0] sm:$0xff]
          %v1062 = vld [vmem:[%s463 + $0xb8] sm:$0xff]
          %v1063 = vld [vmem:[%s463 + $0xc0] sm:$0xff]
          %v1064 = vld [vmem:[%s463 + $0xc8] sm:$0xff]
          %v1065 = vld [vmem:[%s463 + $0xd0] sm:$0xff]
          %v1066 = vld [vmem:[%s463 + $0xd8] sm:$0xff]
          %v1067 = vld [vmem:[%s463 + $0xe0] sm:$0xff]
          %v1068 = vld [vmem:[%s463 + $0xe8] sm:$0xff]
          %v1069 = vld [vmem:[%s463 + $0xf0] sm:$0xff]
          %v1070 = vld [vmem:[%s463 + $0xf8] sm:$0xff]
          %v1071 = vld [vmem:[%s463 + $0x100] sm:$0xff]
          %v1072 = vld [vmem:[%s463 + $0x108] sm:$0xff]
          %v1073 = vld [vmem:[%s463 + $0x110] sm:$0xff]
          %v1074 = vld [vmem:[%s463 + $0x118] sm:$0xff]
          %v1075 = vld [vmem:[%s463 + $0x120] sm:$0xff]
          %v1076 = vld [vmem:[%s463 + $0x128] sm:$0xff]
          %v1077 = vld [vmem:[%s463 + $0x130] sm:$0xff]
          %v1078 = vld [vmem:[%s463 + $0x138] sm:$0xff]
          %v1079 = vld [vmem:[%s463 + $0x140] sm:$0xff]
          %v1080 = vld [vmem:[%s463 + $0x148] sm:$0xff]
          %v1081 = vld [vmem:[%s463 + $0x150] sm:$0xff]
          %v1082 = vld [vmem:[%s463 + $0x158] sm:$0xff]
          %v1083 = vld [vmem:[%s463 + $0x160] sm:$0xff]
          %v1084 = vld [vmem:[%s463 + $0x168] sm:$0xff]
          %v1085 = vld [vmem:[%s463 + $0x170] sm:$0xff]
          %v1086 = vld [vmem:[%s463 + $0x178] sm:$0xff]
          %v1087 = vld [vmem:[%s463 + $0x180] sm:$0xff]
          %v1088 = vld [vmem:[%s463 + $0x188] sm:$0xff]
          %v1089 = vld [vmem:[%s463 + $0x190] sm:$0xff]
          %v1090 = vld [vmem:[%s463 + $0x198] sm:$0xff]
          %v1091 = vld [vmem:[%s463 + $0x1a0] sm:$0xff]
          %v1092 = vld [vmem:[%s463 + $0x1a8] sm:$0xff]
          %v1093 = vld [vmem:[%s463 + $0x1b0] sm:$0xff]
          %v1094 = vld [vmem:[%s463 + $0x1b8] sm:$0xff]
          %v1095 = vld [vmem:[%s463 + $0x1c0] sm:$0xff]
          %v1096 = vld [vmem:[%s463 + $0x1c8] sm:$0xff]
          %v1097 = vld [vmem:[%s463 + $0x1d0] sm:$0xff]
          %v1098 = vld [vmem:[%s463 + $0x1d8] sm:$0xff]
          %v1099 = vld [vmem:[%s463 + $0x1e0] sm:$0xff]
          %v1100 = vld [vmem:[%s463 + $0x1e8] sm:$0xff]
          %v1101 = vld [vmem:[%s463 + $0x1f0] sm:$0xff]
          %v1102 = vld [vmem:[%s463 + $0x1f8] sm:$0xff]
          %v1103 = vld [vmem:[%s463 + $0x200] sm:$0xff]
          %v1104 = vld [vmem:[%s463 + $0x208] sm:$0xff]
          %v1105 = vld [vmem:[%s463 + $0x210] sm:$0xff]
          %v1106 = vld [vmem:[%s463 + $0x218] sm:$0xff]
          %v1107 = vld [vmem:[%s463 + $0x220] sm:$0xff]
          %v1108 = vld [vmem:[%s463 + $0x228] sm:$0xff]
          %v1109 = vld [vmem:[%s463 + $0x230] sm:$0xff]
          %v1110 = vld [vmem:[%s463 + $0x238] sm:$0xff]
          %v1111 = vld [vmem:[%s463 + $0x240] sm:$0xff]
          %v1112 = vld [vmem:[%s463 + $0x248] sm:$0xff]
          %v1113 = vld [vmem:[%s463 + $0x250] sm:$0xff]
          %v1114 = vld [vmem:[%s463 + $0x258] sm:$0xff]
          %v1115 = vld [vmem:[%s463 + $0x260] sm:$0xff]
          %v1116 = vld [vmem:[%s463 + $0x268] sm:$0xff]
          %v1117 = vld [vmem:[%s463 + $0x270] sm:$0xff]
          %v1118 = vld [vmem:[%s463 + $0x278] sm:$0xff]
          %v1119 = vld [vmem:[%s463 + $0x280] sm:$0xff]
          %v1120 = vld [vmem:[%s463 + $0x288] sm:$0xff]
          %v1121 = vld [vmem:[%s463 + $0x290] sm:$0xff]
          %v1122 = vld [vmem:[%s463 + $0x298] sm:$0xff]
          %v1123 = vld [vmem:[%s463 + $0x2a0] sm:$0xff]
          %v1124 = vld [vmem:[%s463 + $0x2a8] sm:$0xff]
          %v1125 = vld [vmem:[%s463 + $0x2b0] sm:$0xff]
          %v1126 = vld [vmem:[%s463 + $0x2b8] sm:$0xff]
          %v1127 = vld [vmem:[%s463 + $0x2c0] sm:$0xff]
          %v1128 = vld [vmem:[%s463 + $0x2c8] sm:$0xff]
          %v1129 = vld [vmem:[%s463 + $0x2d0] sm:$0xff]
          %v1130 = vld [vmem:[%s463 + $0x2d8] sm:$0xff]
          %v1131 = vld [vmem:[%s463 + $0x2e0] sm:$0xff]
          %v1132 = vld [vmem:[%s463 + $0x2e8] sm:$0xff]
          %v1133 = vld [vmem:[%s463 + $0x2f0] sm:$0xff]
          %v1134 = vld [vmem:[%s463 + $0x2f8] sm:$0xff]
          %v1135 = vld [vmem:[%s463 + $0x300] sm:$0xff]
          %v1136 = vld [vmem:[%s463 + $0x308] sm:$0xff]
          %v1137 = vld [vmem:[%s463 + $0x310] sm:$0xff]
          %v1138 = vld [vmem:[%s463 + $0x318] sm:$0xff]
          %v1139 = vld [vmem:[%s463 + $0x320] sm:$0xff]
          %v1140 = vld [vmem:[%s463 + $0x328] sm:$0xff]
          %v1141 = vld [vmem:[%s463 + $0x330] sm:$0xff]
          %v1142 = vld [vmem:[%s463 + $0x338] sm:$0xff]
          %v1143 = vld [vmem:[%s463 + $0x340] sm:$0xff]
          %v1144 = vld [vmem:[%s463 + $0x348] sm:$0xff]
          %v1145 = vld [vmem:[%s463 + $0x350] sm:$0xff]
          %v1146 = vld [vmem:[%s463 + $0x358] sm:$0xff]
          %v1147 = vld [vmem:[%s463 + $0x360] sm:$0xff]
          %v1148 = vld [vmem:[%s463 + $0x368] sm:$0xff]
          %v1149 = vld [vmem:[%s463 + $0x370] sm:$0xff]
          %v1150 = vld [vmem:[%s463 + $0x378] sm:$0xff]
          %v1151 = vld [vmem:[%s463 + $0x380] sm:$0xff]
          %v1152 = vld [vmem:[%s463 + $0x388] sm:$0xff]
          %v1153 = vld [vmem:[%s463 + $0x390] sm:$0xff]
          %v1154 = vld [vmem:[%s463 + $0x398] sm:$0xff]
          %v1155 = vld [vmem:[%s463 + $0x3a0] sm:$0xff]
          %v1156 = vld [vmem:[%s463 + $0x3a8] sm:$0xff]
          %v1157 = vld [vmem:[%s463 + $0x3b0] sm:$0xff]
          %v1158 = vld [vmem:[%s463 + $0x3b8] sm:$0xff]
          %v1159 = vld [vmem:[%s463 + $0x3c0] sm:$0xff]
          %v1160 = vld [vmem:[%s463 + $0x3c8] sm:$0xff]
          %v1161 = vld [vmem:[%s463 + $0x3d0] sm:$0xff]
          %v1162 = vld [vmem:[%s463 + $0x3d8] sm:$0xff]
          %v1163 = vld [vmem:[%s463 + $0x3e0] sm:$0xff]
          %v1164 = vld [vmem:[%s463 + $0x3e8] sm:$0xff]
          %v1165 = vld [vmem:[%s463 + $0x3f0] sm:$0xff]
          %v1166 = vld [vmem:[%s463 + $0x3f8] sm:$0xff]
          %v1167 = vld [vmem:[%s463 + $0x400] sm:$0xff]
          %v1168 = vld [vmem:[%s463 + $0x408] sm:$0xff]
          %v1169 = vld [vmem:[%s463 + $0x410] sm:$0xff]
          %v1170 = vld [vmem:[%s463 + $0x418] sm:$0xff]
          %v1171 = vld [vmem:[%s463 + $0x420] sm:$0xff]
          %v1172 = vld [vmem:[%s463 + $0x428] sm:$0xff]
          %v1173 = vld [vmem:[%s463 + $0x430] sm:$0xff]
          %v1174 = vld [vmem:[%s463 + $0x438] sm:$0xff]
          %v1175 = vld [vmem:[%s463 + $0x440] sm:$0xff]
          %v1176 = vld [vmem:[%s463 + $0x448] sm:$0xff]
          %v1177 = vld [vmem:[%s463 + $0x450] sm:$0xff]
          %v1178 = vld [vmem:[%s463 + $0x458] sm:$0xff]
          %v1179 = vld [vmem:[%s463 + $0x460] sm:$0xff]
          %v1180 = vld [vmem:[%s463 + $0x468] sm:$0xff]
          %v1181 = vld [vmem:[%s463 + $0x470] sm:$0xff]
          %v1182 = vld [vmem:[%s463 + $0x478] sm:$0xff]
          %v1183 = vld [vmem:[%s463 + $0x480] sm:$0xff]
          %v1184 = vld [vmem:[%s463 + $0x488] sm:$0xff]
          %v1185 = vld [vmem:[%s463 + $0x490] sm:$0xff]
          %v1186 = vld [vmem:[%s463 + $0x498] sm:$0xff]
          %v1187 = vld [vmem:[%s463 + $0x4a0] sm:$0xff]
          %v1188 = vld [vmem:[%s463 + $0x4a8] sm:$0xff]
          %v1189 = vld [vmem:[%s463 + $0x4b0] sm:$0xff]
          %v1190 = vld [vmem:[%s463 + $0x4b8] sm:$0xff]
          %v1191 = vld [vmem:[%s463 + $0x4c0] sm:$0xff]
          %v1192 = vld [vmem:[%s463 + $0x4c8] sm:$0xff]
          %v1193 = vld [vmem:[%s463 + $0x4d0] sm:$0xff]
          %v1194 = vld [vmem:[%s463 + $0x4d8] sm:$0xff]
          %v1195 = vld [vmem:[%s463 + $0x4e0] sm:$0xff]
          %v1196 = vld [vmem:[%s463 + $0x4e8] sm:$0xff]
          %v1197 = vld [vmem:[%s463 + $0x4f0] sm:$0xff]
          %v1198 = vld [vmem:[%s463 + $0x4f8] sm:$0xff]
          %v1199 = vld [vmem:[%s463 + $0x500] sm:$0xff]
          %v1200 = vld [vmem:[%s463 + $0x508] sm:$0xff]
          %v1201 = vld [vmem:[%s463 + $0x510] sm:$0xff]
          %v1202 = vld [vmem:[%s463 + $0x518] sm:$0xff]
          %v1203 = vld [vmem:[%s463 + $0x520] sm:$0xff]
          %v1204 = vld [vmem:[%s463 + $0x528] sm:$0xff]
          %v1205 = vld [vmem:[%s463 + $0x530] sm:$0xff]
          %v1206 = vld [vmem:[%s463 + $0x538] sm:$0xff]
          %v1207 = vld [vmem:[%s463 + $0x540] sm:$0xff]
          %v1208 = vld [vmem:[%s463 + $0x548] sm:$0xff]
          %v1209 = vld [vmem:[%s463 + $0x550] sm:$0xff]
          %v1210 = vld [vmem:[%s463 + $0x558] sm:$0xff]
          %v1211 = vld [vmem:[%s463 + $0x560] sm:$0xff]
          %v1212 = vld [vmem:[%s463 + $0x568] sm:$0xff]
          %v1213 = vld [vmem:[%s463 + $0x570] sm:$0xff]
          %v1214 = vld [vmem:[%s463 + $0x578] sm:$0xff]
          %v1215 = vld [vmem:[%s463 + $0x580] sm:$0xff]
          %v1216 = vld [vmem:[%s463 + $0x588] sm:$0xff]
          %v1217 = vld [vmem:[%s463 + $0x590] sm:$0xff]
          %v1218 = vld [vmem:[%s463 + $0x598] sm:$0xff]
          %v1219 = vld [vmem:[%s463 + $0x5a0] sm:$0xff]
          %v1220 = vld [vmem:[%s463 + $0x5a8] sm:$0xff]
          %v1221 = vld [vmem:[%s463 + $0x5b0] sm:$0xff]
          %v1222 = vld [vmem:[%s463 + $0x5b8] sm:$0xff]
          %v1223 = vld [vmem:[%s463 + $0x5c0] sm:$0xff]
          %v1224 = vld [vmem:[%s463 + $0x5c8] sm:$0xff]
          %v1225 = vld [vmem:[%s463 + $0x5d0] sm:$0xff]
          %v1226 = vld [vmem:[%s463 + $0x5d8] sm:$0xff]
          %v1227 = vld [vmem:[%s463 + $0x5e0] sm:$0xff]
          %v1228 = vld [vmem:[%s463 + $0x5e8] sm:$0xff]
          %v1229 = vld [vmem:[%s463 + $0x5f0] sm:$0xff]
          %v1230 = vld [vmem:[%s463 + $0x5f8] sm:$0xff]
          %v1231 = vunpack.c.l.s8.bf16 %v1039
          %v1232 = vunpack.c.l.s8.bf16 %v1040
          %v1233 = vunpack.c.l.s8.bf16 %v1041
          %v1234 = vunpack.c.l.s8.bf16 %v1042
          %v1235 = vunpack.c.l.s8.bf16 %v1043
          %v1236 = vunpack.c.l.s8.bf16 %v1044
          %v1237 = vunpack.c.l.s8.bf16 %v1045
          %v1238 = vunpack.c.l.s8.bf16 %v1046
          %v1239 = vunpack.c.l.s8.bf16 %v1047
          %v1240 = vunpack.c.l.s8.bf16 %v1048
          %v1241 = vunpack.c.l.s8.bf16 %v1049
          %v1242 = vunpack.c.l.s8.bf16 %v1050
          %v1243 = vunpack.c.h.s8.bf16 %v1039
          %v1244 = vunpack.c.h.s8.bf16 %v1040
          %v1245 = vunpack.c.h.s8.bf16 %v1041
          %v1246 = vunpack.c.h.s8.bf16 %v1042
          %v1247 = vunpack.c.h.s8.bf16 %v1043
          %v1248 = vunpack.c.h.s8.bf16 %v1044
          %v1249 = vunpack.c.h.s8.bf16 %v1045
          %v1250 = vunpack.c.h.s8.bf16 %v1046
          %v1251 = vunpack.c.h.s8.bf16 %v1047
          %v1252 = vunpack.c.h.s8.bf16 %v1048
          %v1253 = vunpack.c.h.s8.bf16 %v1049
          %v1254 = vunpack.c.h.s8.bf16 %v1050
          %v1255 = vunpack.c.l.s8.bf16 %v1051
          %v1256 = vunpack.c.l.s8.bf16 %v1052
          %v1257 = vunpack.c.l.s8.bf16 %v1053
          %v1258 = vunpack.c.l.s8.bf16 %v1054
          %v1259 = vunpack.c.l.s8.bf16 %v1055
          %v1260 = vunpack.c.l.s8.bf16 %v1056
          %v1261 = vunpack.c.l.s8.bf16 %v1057
          %v1262 = vunpack.c.l.s8.bf16 %v1058
          %v1263 = vunpack.c.l.s8.bf16 %v1059
          %v1264 = vunpack.c.l.s8.bf16 %v1060
          %v1265 = vunpack.c.l.s8.bf16 %v1061
          %v1266 = vunpack.c.l.s8.bf16 %v1062
          %v1267 = vunpack.c.h.s8.bf16 %v1051
          %v1268 = vunpack.c.h.s8.bf16 %v1052
          %v1269 = vunpack.c.h.s8.bf16 %v1053
          %v1270 = vunpack.c.h.s8.bf16 %v1054
          %v1271 = vunpack.c.h.s8.bf16 %v1055
          %v1272 = vunpack.c.h.s8.bf16 %v1056
          %v1273 = vunpack.c.h.s8.bf16 %v1057
          %v1274 = vunpack.c.h.s8.bf16 %v1058
          %v1275 = vunpack.c.h.s8.bf16 %v1059
          %v1276 = vunpack.c.h.s8.bf16 %v1060
          %v1277 = vunpack.c.h.s8.bf16 %v1061
          %v1278 = vunpack.c.h.s8.bf16 %v1062
          %v1279 = vunpack.c.l.s8.bf16 %v1063
          %v1280 = vunpack.c.l.s8.bf16 %v1064
          %v1281 = vunpack.c.l.s8.bf16 %v1065
          %v1282 = vunpack.c.l.s8.bf16 %v1066
          %v1283 = vunpack.c.l.s8.bf16 %v1067
          %v1284 = vunpack.c.l.s8.bf16 %v1068
          %v1285 = vunpack.c.l.s8.bf16 %v1069
          %v1286 = vunpack.c.l.s8.bf16 %v1070
          %v1287 = vunpack.c.l.s8.bf16 %v1071
          %v1288 = vunpack.c.l.s8.bf16 %v1072
          %v1289 = vunpack.c.l.s8.bf16 %v1073
          %v1290 = vunpack.c.l.s8.bf16 %v1074
          %v1291 = vunpack.c.h.s8.bf16 %v1063
          %v1292 = vunpack.c.h.s8.bf16 %v1064
          %v1293 = vunpack.c.h.s8.bf16 %v1065
          %v1294 = vunpack.c.h.s8.bf16 %v1066
          %v1295 = vunpack.c.h.s8.bf16 %v1067
          %v1296 = vunpack.c.h.s8.bf16 %v1068
          %v1297 = vunpack.c.h.s8.bf16 %v1069
          %v1298 = vunpack.c.h.s8.bf16 %v1070
          %v1299 = vunpack.c.h.s8.bf16 %v1071
          %v1300 = vunpack.c.h.s8.bf16 %v1072
          %v1301 = vunpack.c.h.s8.bf16 %v1073
          %v1302 = vunpack.c.h.s8.bf16 %v1074
          %v1303 = vunpack.c.l.s8.bf16 %v1075
          %v1304 = vunpack.c.l.s8.bf16 %v1076
          %v1305 = vunpack.c.l.s8.bf16 %v1077
          %v1306 = vunpack.c.l.s8.bf16 %v1078
          %v1307 = vunpack.c.l.s8.bf16 %v1079
          %v1308 = vunpack.c.l.s8.bf16 %v1080
          %v1309 = vunpack.c.l.s8.bf16 %v1081
          %v1310 = vunpack.c.l.s8.bf16 %v1082
          %v1311 = vunpack.c.l.s8.bf16 %v1083
          %v1312 = vunpack.c.l.s8.bf16 %v1084
          %v1313 = vunpack.c.l.s8.bf16 %v1085
          %v1314 = vunpack.c.l.s8.bf16 %v1086
          %v1315 = vunpack.c.h.s8.bf16 %v1075
          %v1316 = vunpack.c.h.s8.bf16 %v1076
          %v1317 = vunpack.c.h.s8.bf16 %v1077
          %v1318 = vunpack.c.h.s8.bf16 %v1078
          %v1319 = vunpack.c.h.s8.bf16 %v1079
          %v1320 = vunpack.c.h.s8.bf16 %v1080
          %v1321 = vunpack.c.h.s8.bf16 %v1081
          %v1322 = vunpack.c.h.s8.bf16 %v1082
          %v1323 = vunpack.c.h.s8.bf16 %v1083
          %v1324 = vunpack.c.h.s8.bf16 %v1084
          %v1325 = vunpack.c.h.s8.bf16 %v1085
          %v1326 = vunpack.c.h.s8.bf16 %v1086
          %v1327 = vunpack.c.l.s8.bf16 %v1087
          %v1328 = vunpack.c.l.s8.bf16 %v1088
          %v1329 = vunpack.c.l.s8.bf16 %v1089
          %v1330 = vunpack.c.l.s8.bf16 %v1090
          %v1331 = vunpack.c.l.s8.bf16 %v1091
          %v1332 = vunpack.c.l.s8.bf16 %v1092
          %v1333 = vunpack.c.l.s8.bf16 %v1093
          %v1334 = vunpack.c.l.s8.bf16 %v1094
          %v1335 = vunpack.c.l.s8.bf16 %v1095
          %v1336 = vunpack.c.l.s8.bf16 %v1096
          %v1337 = vunpack.c.l.s8.bf16 %v1097
          %v1338 = vunpack.c.l.s8.bf16 %v1098
          %v1339 = vunpack.c.h.s8.bf16 %v1087
          %v1340 = vunpack.c.h.s8.bf16 %v1088
          %v1341 = vunpack.c.h.s8.bf16 %v1089
          %v1342 = vunpack.c.h.s8.bf16 %v1090
          %v1343 = vunpack.c.h.s8.bf16 %v1091
          %v1344 = vunpack.c.h.s8.bf16 %v1092
          %v1345 = vunpack.c.h.s8.bf16 %v1093
          %v1346 = vunpack.c.h.s8.bf16 %v1094
          %v1347 = vunpack.c.h.s8.bf16 %v1095
          %v1348 = vunpack.c.h.s8.bf16 %v1096
          %v1349 = vunpack.c.h.s8.bf16 %v1097
          %v1350 = vunpack.c.h.s8.bf16 %v1098
          %v1351 = vunpack.c.l.s8.bf16 %v1099
          %v1352 = vunpack.c.l.s8.bf16 %v1100
          %v1353 = vunpack.c.l.s8.bf16 %v1101
          %v1354 = vunpack.c.l.s8.bf16 %v1102
          %v1355 = vunpack.c.l.s8.bf16 %v1103
          %v1356 = vunpack.c.l.s8.bf16 %v1104
          %v1357 = vunpack.c.l.s8.bf16 %v1105
          %v1358 = vunpack.c.l.s8.bf16 %v1106
          %v1359 = vunpack.c.l.s8.bf16 %v1107
          %v1360 = vunpack.c.l.s8.bf16 %v1108
          %v1361 = vunpack.c.l.s8.bf16 %v1109
          %v1362 = vunpack.c.l.s8.bf16 %v1110
          %v1363 = vunpack.c.h.s8.bf16 %v1099
          %v1364 = vunpack.c.h.s8.bf16 %v1100
          %v1365 = vunpack.c.h.s8.bf16 %v1101
          %v1366 = vunpack.c.h.s8.bf16 %v1102
          %v1367 = vunpack.c.h.s8.bf16 %v1103
          %v1368 = vunpack.c.h.s8.bf16 %v1104
          %v1369 = vunpack.c.h.s8.bf16 %v1105
          %v1370 = vunpack.c.h.s8.bf16 %v1106
          %v1371 = vunpack.c.h.s8.bf16 %v1107
          %v1372 = vunpack.c.h.s8.bf16 %v1108
          %v1373 = vunpack.c.h.s8.bf16 %v1109
          %v1374 = vunpack.c.h.s8.bf16 %v1110
          %v1375 = vunpack.c.l.s8.bf16 %v1111
          %v1376 = vunpack.c.l.s8.bf16 %v1112
          %v1377 = vunpack.c.l.s8.bf16 %v1113
          %v1378 = vunpack.c.l.s8.bf16 %v1114
          %v1379 = vunpack.c.l.s8.bf16 %v1115
          %v1380 = vunpack.c.l.s8.bf16 %v1116
          %v1381 = vunpack.c.l.s8.bf16 %v1117
          %v1382 = vunpack.c.l.s8.bf16 %v1118
          %v1383 = vunpack.c.l.s8.bf16 %v1119
          %v1384 = vunpack.c.l.s8.bf16 %v1120
          %v1385 = vunpack.c.l.s8.bf16 %v1121
          %v1386 = vunpack.c.l.s8.bf16 %v1122
          %v1387 = vunpack.c.h.s8.bf16 %v1111
          %v1388 = vunpack.c.h.s8.bf16 %v1112
          %v1389 = vunpack.c.h.s8.bf16 %v1113
          %v1390 = vunpack.c.h.s8.bf16 %v1114
          %v1391 = vunpack.c.h.s8.bf16 %v1115
          %v1392 = vunpack.c.h.s8.bf16 %v1116
          %v1393 = vunpack.c.h.s8.bf16 %v1117
          %v1394 = vunpack.c.h.s8.bf16 %v1118
          %v1395 = vunpack.c.h.s8.bf16 %v1119
          %v1396 = vunpack.c.h.s8.bf16 %v1120
          %v1397 = vunpack.c.h.s8.bf16 %v1121
          %v1398 = vunpack.c.h.s8.bf16 %v1122
          %v1399 = vunpack.c.l.s8.bf16 %v1123
          %v1400 = vunpack.c.l.s8.bf16 %v1124
          %v1401 = vunpack.c.l.s8.bf16 %v1125
          %v1402 = vunpack.c.l.s8.bf16 %v1126
          %v1403 = vunpack.c.l.s8.bf16 %v1127
          %v1404 = vunpack.c.l.s8.bf16 %v1128
          %v1405 = vunpack.c.l.s8.bf16 %v1129
          %v1406 = vunpack.c.l.s8.bf16 %v1130
          %v1407 = vunpack.c.l.s8.bf16 %v1131
          %v1408 = vunpack.c.l.s8.bf16 %v1132
          %v1409 = vunpack.c.l.s8.bf16 %v1133
          %v1410 = vunpack.c.l.s8.bf16 %v1134
          %v1411 = vunpack.c.h.s8.bf16 %v1123
          %v1412 = vunpack.c.h.s8.bf16 %v1124
          %v1413 = vunpack.c.h.s8.bf16 %v1125
          %v1414 = vunpack.c.h.s8.bf16 %v1126
          %v1415 = vunpack.c.h.s8.bf16 %v1127
          %v1416 = vunpack.c.h.s8.bf16 %v1128
          %v1417 = vunpack.c.h.s8.bf16 %v1129
          %v1418 = vunpack.c.h.s8.bf16 %v1130
          %v1419 = vunpack.c.h.s8.bf16 %v1131
          %v1420 = vunpack.c.h.s8.bf16 %v1132
          %v1421 = vunpack.c.h.s8.bf16 %v1133
          %v1422 = vunpack.c.h.s8.bf16 %v1134
          %v1423 = vunpack.c.l.s8.bf16 %v1135
          %v1424 = vunpack.c.l.s8.bf16 %v1136
          %v1425 = vunpack.c.l.s8.bf16 %v1137
          %v1426 = vunpack.c.l.s8.bf16 %v1138
          %v1427 = vunpack.c.l.s8.bf16 %v1139
          %v1428 = vunpack.c.l.s8.bf16 %v1140
          %v1429 = vunpack.c.l.s8.bf16 %v1141
          %v1430 = vunpack.c.l.s8.bf16 %v1142
          %v1431 = vunpack.c.l.s8.bf16 %v1143
          %v1432 = vunpack.c.l.s8.bf16 %v1144
          %v1433 = vunpack.c.l.s8.bf16 %v1145
          %v1434 = vunpack.c.l.s8.bf16 %v1146
          %v1435 = vunpack.c.h.s8.bf16 %v1135
          %v1436 = vunpack.c.h.s8.bf16 %v1136
          %v1437 = vunpack.c.h.s8.bf16 %v1137
          %v1438 = vunpack.c.h.s8.bf16 %v1138
          %v1439 = vunpack.c.h.s8.bf16 %v1139
          %v1440 = vunpack.c.h.s8.bf16 %v1140
          %v1441 = vunpack.c.h.s8.bf16 %v1141
          %v1442 = vunpack.c.h.s8.bf16 %v1142
          %v1443 = vunpack.c.h.s8.bf16 %v1143
          %v1444 = vunpack.c.h.s8.bf16 %v1144
          %v1445 = vunpack.c.h.s8.bf16 %v1145
          %v1446 = vunpack.c.h.s8.bf16 %v1146
          %v1447 = vunpack.c.l.s8.bf16 %v1147
          %v1448 = vunpack.c.l.s8.bf16 %v1148
          %v1449 = vunpack.c.l.s8.bf16 %v1149
          %v1450 = vunpack.c.l.s8.bf16 %v1150
          %v1451 = vunpack.c.l.s8.bf16 %v1151
          %v1452 = vunpack.c.l.s8.bf16 %v1152
          %v1453 = vunpack.c.l.s8.bf16 %v1153
          %v1454 = vunpack.c.l.s8.bf16 %v1154
          %v1455 = vunpack.c.l.s8.bf16 %v1155
          %v1456 = vunpack.c.l.s8.bf16 %v1156
          %v1457 = vunpack.c.l.s8.bf16 %v1157
          %v1458 = vunpack.c.l.s8.bf16 %v1158
          %v1459 = vunpack.c.h.s8.bf16 %v1147
          %v1460 = vunpack.c.h.s8.bf16 %v1148
          %v1461 = vunpack.c.h.s8.bf16 %v1149
          %v1462 = vunpack.c.h.s8.bf16 %v1150
          %v1463 = vunpack.c.h.s8.bf16 %v1151
          %v1464 = vunpack.c.h.s8.bf16 %v1152
          %v1465 = vunpack.c.h.s8.bf16 %v1153
          %v1466 = vunpack.c.h.s8.bf16 %v1154
          %v1467 = vunpack.c.h.s8.bf16 %v1155
          %v1468 = vunpack.c.h.s8.bf16 %v1156
          %v1469 = vunpack.c.h.s8.bf16 %v1157
          %v1470 = vunpack.c.h.s8.bf16 %v1158
          %v1471 = vunpack.c.l.s8.bf16 %v1159
          %v1472 = vunpack.c.l.s8.bf16 %v1160
          %v1473 = vunpack.c.l.s8.bf16 %v1161
          %v1474 = vunpack.c.l.s8.bf16 %v1162
          %v1475 = vunpack.c.l.s8.bf16 %v1163
          %v1476 = vunpack.c.l.s8.bf16 %v1164
          %v1477 = vunpack.c.l.s8.bf16 %v1165
          %v1478 = vunpack.c.l.s8.bf16 %v1166
          %v1479 = vunpack.c.l.s8.bf16 %v1167
          %v1480 = vunpack.c.l.s8.bf16 %v1168
          %v1481 = vunpack.c.l.s8.bf16 %v1169
          %v1482 = vunpack.c.l.s8.bf16 %v1170
          %v1483 = vunpack.c.h.s8.bf16 %v1159
          %v1484 = vunpack.c.h.s8.bf16 %v1160
          %v1485 = vunpack.c.h.s8.bf16 %v1161
          %v1486 = vunpack.c.h.s8.bf16 %v1162
          %v1487 = vunpack.c.h.s8.bf16 %v1163
          %v1488 = vunpack.c.h.s8.bf16 %v1164
          %v1489 = vunpack.c.h.s8.bf16 %v1165
          %v1490 = vunpack.c.h.s8.bf16 %v1166
          %v1491 = vunpack.c.h.s8.bf16 %v1167
          %v1492 = vunpack.c.h.s8.bf16 %v1168
          %v1493 = vunpack.c.h.s8.bf16 %v1169
          %v1494 = vunpack.c.h.s8.bf16 %v1170
          %v1495 = vunpack.c.l.s8.bf16 %v1171
          %v1496 = vunpack.c.l.s8.bf16 %v1172
          %v1497 = vunpack.c.l.s8.bf16 %v1173
          %v1498 = vunpack.c.l.s8.bf16 %v1174
          %v1499 = vunpack.c.l.s8.bf16 %v1175
          %v1500 = vunpack.c.l.s8.bf16 %v1176
          %v1501 = vunpack.c.l.s8.bf16 %v1177
          %v1502 = vunpack.c.l.s8.bf16 %v1178
          %v1503 = vunpack.c.l.s8.bf16 %v1179
          %v1504 = vunpack.c.l.s8.bf16 %v1180
          %v1505 = vunpack.c.l.s8.bf16 %v1181
          %v1506 = vunpack.c.l.s8.bf16 %v1182
          %v1507 = vunpack.c.h.s8.bf16 %v1171
          %v1508 = vunpack.c.h.s8.bf16 %v1172
          %v1509 = vunpack.c.h.s8.bf16 %v1173
          %v1510 = vunpack.c.h.s8.bf16 %v1174
          %v1511 = vunpack.c.h.s8.bf16 %v1175
          %v1512 = vunpack.c.h.s8.bf16 %v1176
          %v1513 = vunpack.c.h.s8.bf16 %v1177
          %v1514 = vunpack.c.h.s8.bf16 %v1178
          %v1515 = vunpack.c.h.s8.bf16 %v1179
          %v1516 = vunpack.c.h.s8.bf16 %v1180
          %v1517 = vunpack.c.h.s8.bf16 %v1181
          %v1518 = vunpack.c.h.s8.bf16 %v1182
          %v1519 = vunpack.c.l.s8.bf16 %v1183
          %v1520 = vunpack.c.l.s8.bf16 %v1184
          %v1521 = vunpack.c.l.s8.bf16 %v1185
          %v1522 = vunpack.c.l.s8.bf16 %v1186
          %v1523 = vunpack.c.l.s8.bf16 %v1187
          %v1524 = vunpack.c.l.s8.bf16 %v1188
          %v1525 = vunpack.c.l.s8.bf16 %v1189
          %v1526 = vunpack.c.l.s8.bf16 %v1190
          %v1527 = vunpack.c.l.s8.bf16 %v1191
          %v1528 = vunpack.c.l.s8.bf16 %v1192
          %v1529 = vunpack.c.l.s8.bf16 %v1193
          %v1530 = vunpack.c.l.s8.bf16 %v1194
          %v1531 = vunpack.c.h.s8.bf16 %v1183
          %v1532 = vunpack.c.h.s8.bf16 %v1184
          %v1533 = vunpack.c.h.s8.bf16 %v1185
          %v1534 = vunpack.c.h.s8.bf16 %v1186
          %v1535 = vunpack.c.h.s8.bf16 %v1187
          %v1536 = vunpack.c.h.s8.bf16 %v1188
          %v1537 = vunpack.c.h.s8.bf16 %v1189
          %v1538 = vunpack.c.h.s8.bf16 %v1190
          %v1539 = vunpack.c.h.s8.bf16 %v1191
          %v1540 = vunpack.c.h.s8.bf16 %v1192
          %v1541 = vunpack.c.h.s8.bf16 %v1193
          %v1542 = vunpack.c.h.s8.bf16 %v1194
          %v1543 = vunpack.c.l.s8.bf16 %v1195
          %v1544 = vunpack.c.l.s8.bf16 %v1196
          %v1545 = vunpack.c.l.s8.bf16 %v1197
          %v1546 = vunpack.c.l.s8.bf16 %v1198
          %v1547 = vunpack.c.l.s8.bf16 %v1199
          %v1548 = vunpack.c.l.s8.bf16 %v1200
          %v1549 = vunpack.c.l.s8.bf16 %v1201
          %v1550 = vunpack.c.l.s8.bf16 %v1202
          %v1551 = vunpack.c.l.s8.bf16 %v1203
          %v1552 = vunpack.c.l.s8.bf16 %v1204
          %v1553 = vunpack.c.l.s8.bf16 %v1205
          %v1554 = vunpack.c.l.s8.bf16 %v1206
          %v1555 = vunpack.c.h.s8.bf16 %v1195
          %v1556 = vunpack.c.h.s8.bf16 %v1196
          %v1557 = vunpack.c.h.s8.bf16 %v1197
          %v1558 = vunpack.c.h.s8.bf16 %v1198
          %v1559 = vunpack.c.h.s8.bf16 %v1199
          %v1560 = vunpack.c.h.s8.bf16 %v1200
          %v1561 = vunpack.c.h.s8.bf16 %v1201
          %v1562 = vunpack.c.h.s8.bf16 %v1202
          %v1563 = vunpack.c.h.s8.bf16 %v1203
          %v1564 = vunpack.c.h.s8.bf16 %v1204
          %v1565 = vunpack.c.h.s8.bf16 %v1205
          %v1566 = vunpack.c.h.s8.bf16 %v1206
          %v1567 = vunpack.c.l.s8.bf16 %v1207
          %v1568 = vunpack.c.l.s8.bf16 %v1208
          %v1569 = vunpack.c.l.s8.bf16 %v1209
          %v1570 = vunpack.c.l.s8.bf16 %v1210
          %v1571 = vunpack.c.l.s8.bf16 %v1211
          %v1572 = vunpack.c.l.s8.bf16 %v1212
          %v1573 = vunpack.c.l.s8.bf16 %v1213
          %v1574 = vunpack.c.l.s8.bf16 %v1214
          %v1575 = vunpack.c.l.s8.bf16 %v1215
          %v1576 = vunpack.c.l.s8.bf16 %v1216
          %v1577 = vunpack.c.l.s8.bf16 %v1217
          %v1578 = vunpack.c.l.s8.bf16 %v1218
          %v1579 = vunpack.c.h.s8.bf16 %v1207
          %v1580 = vunpack.c.h.s8.bf16 %v1208
          %v1581 = vunpack.c.h.s8.bf16 %v1209
          %v1582 = vunpack.c.h.s8.bf16 %v1210
          %v1583 = vunpack.c.h.s8.bf16 %v1211
          %v1584 = vunpack.c.h.s8.bf16 %v1212
          %v1585 = vunpack.c.h.s8.bf16 %v1213
          %v1586 = vunpack.c.h.s8.bf16 %v1214
          %v1587 = vunpack.c.h.s8.bf16 %v1215
          %v1588 = vunpack.c.h.s8.bf16 %v1216
          %v1589 = vunpack.c.h.s8.bf16 %v1217
          %v1590 = vunpack.c.h.s8.bf16 %v1218
          %v1591 = vunpack.c.l.s8.bf16 %v1219
          %v1592 = vunpack.c.l.s8.bf16 %v1220
          %v1593 = vunpack.c.l.s8.bf16 %v1221
          %v1594 = vunpack.c.l.s8.bf16 %v1222
          %v1595 = vunpack.c.l.s8.bf16 %v1223
          %v1596 = vunpack.c.l.s8.bf16 %v1224
          %v1597 = vunpack.c.l.s8.bf16 %v1225
          %v1598 = vunpack.c.l.s8.bf16 %v1226
          %v1599 = vunpack.c.l.s8.bf16 %v1227
          %v1600 = vunpack.c.l.s8.bf16 %v1228
          %v1601 = vunpack.c.l.s8.bf16 %v1229
          %v1602 = vunpack.c.l.s8.bf16 %v1230
          %v1603 = vunpack.c.h.s8.bf16 %v1219
          %v1604 = vunpack.c.h.s8.bf16 %v1220
          %v1605 = vunpack.c.h.s8.bf16 %v1221
          %v1606 = vunpack.c.h.s8.bf16 %v1222
          %v1607 = vunpack.c.h.s8.bf16 %v1223
          %v1608 = vunpack.c.h.s8.bf16 %v1224
          %v1609 = vunpack.c.h.s8.bf16 %v1225
          %v1610 = vunpack.c.h.s8.bf16 %v1226
          %v1611 = vunpack.c.h.s8.bf16 %v1227
          %v1612 = vunpack.c.h.s8.bf16 %v1228
          %v1613 = vunpack.c.h.s8.bf16 %v1229
          %v1614 = vunpack.c.h.s8.bf16 %v1230
          %v1615 = vld [vmem:[#allocation2] sm:$0xff]
          %v1616 = vld [vmem:[#allocation2 + $0x8] sm:$0xff]
          %v1617 = vld [vmem:[#allocation2 + $0x10] sm:$0xff]
          %v1618 = vld [vmem:[#allocation2 + $0x18] sm:$0xff]
          %v1619 = vpack.c.bf16 %v1615, %v1615
          %v1620 = vpack.c.bf16 %v1616, %v1616
          %v1621 = vpack.c.bf16 %v1617, %v1617
          %v1622 = vpack.c.bf16 %v1618, %v1618
          %1623 = vmatprep.subr.bf16.mxu0 %v1232
          %1624 = vmatpush1.bf16.msra.mxu0 %v1231
          %1625 = vmatprep.subr.bf16.mxu0 %v1244
          %1626 = vmatpush1.bf16.msra.mxu0 %v1243
          %1627 = vmatprep.subr.bf16.mxu0 %v1256
          %1628 = vmatpush1.bf16.msra.mxu0 %v1255
          %1629 = vmatprep.subr.bf16.mxu0 %v1268
          %1630 = vmatpush1.bf16.msra.mxu0 %v1267
          %1631 = vmatprep.subr.bf16.mxu0 %v1280
          %1632 = vmatpush1.bf16.msra.mxu0 %v1279
          %1633 = vmatprep.subr.bf16.mxu0 %v1292
          %1634 = vmatpush1.bf16.msra.mxu0 %v1291
          %1635 = vmatprep.subr.bf16.mxu0 %v1304
          %1636 = vmatpush1.bf16.msra.mxu0 %v1303
          %1637 = vmatprep.subr.bf16.mxu0 %v1316
          %1638 = vmatpush1.bf16.msra.mxu0 %v1315
          %1639 = vmatprep.subr.bf16.mxu0 %v1328
          %1640 = vmatpush1.bf16.msra.mxu0 %v1327
          %1641 = vmatprep.subr.bf16.mxu0 %v1340
          %1642 = vmatpush1.bf16.msra.mxu0 %v1339
          %1643 = vmatprep.subr.bf16.mxu0 %v1352
          %1644 = vmatpush1.bf16.msra.mxu0 %v1351
          %1645 = vmatprep.subr.bf16.mxu0 %v1364
          %1646 = vmatpush1.bf16.msra.mxu0 %v1363
          %1647 = vmatprep.subr.bf16.mxu0 %v1376
          %1648 = vmatpush1.bf16.msra.mxu0 %v1375
          %1649 = vmatprep.subr.bf16.mxu0 %v1388
          %1650 = vmatpush1.bf16.msra.mxu0 %v1387
          %1651 = vmatprep.subr.bf16.mxu0 %v1400
          %1652 = vmatpush1.bf16.msra.mxu0 %v1399
          %1653 = vmatprep.subr.bf16.mxu0 %v1412
          %1654 = vmatpush1.bf16.msra.mxu0 %v1411
          %1655 = vmatprep.mubr.bf16.mxu0 %v1620
          %1656 = vmatmul.mubr.bf16.gmra.mrb[0].mxu0 %v1619
          %v1657 = vpop.f32.mrb[0].mxu0
          %v1658 = vadd.f32 0.0, %v1657
          %v1659 = vpop.f32.mrb[0].mxu0
          %v1660 = vadd.f32 0.0, %v1659
          %v1661 = vpop.f32.mrb[0].mxu0
          %v1662 = vpop.f32.mrb[0].mxu0
          %1663 = vdwg.mxu0
          %1664 = vmatprep.subr.bf16.mxu0 %v1424
          %1665 = vmatpush1.bf16.msra.mxu0 %v1423
          %1666 = vmatprep.subr.bf16.mxu0 %v1436
          %1667 = vmatpush1.bf16.msra.mxu0 %v1435
          %1668 = vmatprep.subr.bf16.mxu0 %v1448
          %1669 = vmatpush1.bf16.msra.mxu0 %v1447
          %1670 = vmatprep.subr.bf16.mxu0 %v1460
          %1671 = vmatpush1.bf16.msra.mxu0 %v1459
          %1672 = vmatprep.subr.bf16.mxu0 %v1472
          %1673 = vmatpush1.bf16.msra.mxu0 %v1471
          %1674 = vmatprep.subr.bf16.mxu0 %v1484
          %1675 = vmatpush1.bf16.msra.mxu0 %v1483
          %1676 = vmatprep.subr.bf16.mxu0 %v1496
          %1677 = vmatpush1.bf16.msra.mxu0 %v1495
          %1678 = vmatprep.subr.bf16.mxu0 %v1508
          %1679 = vmatpush1.bf16.msra.mxu0 %v1507
          %1680 = vmatprep.subr.bf16.mxu0 %v1520
          %1681 = vmatpush1.bf16.msra.mxu0 %v1519
          %1682 = vmatprep.subr.bf16.mxu0 %v1532
          %1683 = vmatpush1.bf16.msra.mxu0 %v1531
          %1684 = vmatprep.subr.bf16.mxu0 %v1544
          %1685 = vmatpush1.bf16.msra.mxu0 %v1543
          %1686 = vmatprep.subr.bf16.mxu0 %v1556
          %1687 = vmatpush1.bf16.msra.mxu0 %v1555
          %1688 = vmatprep.subr.bf16.mxu0 %v1568
          %1689 = vmatpush1.bf16.msra.mxu0 %v1567
          %1690 = vmatprep.subr.bf16.mxu0 %v1580
          %1691 = vmatpush1.bf16.msra.mxu0 %v1579
          %1692 = vmatprep.subr.bf16.mxu0 %v1592
          %1693 = vmatpush1.bf16.msra.mxu0 %v1591
          %1694 = vmatprep.subr.bf16.mxu0 %v1604
          %1695 = vmatpush1.bf16.msra.mxu0 %v1603
          %1696 = vmatprep.mubr.bf16.mxu0 %v1622
          %1697 = vmatmul.mubr.bf16.gmra.mrb[0].mxu0 %v1621
          %v1698 = vpop.f32.mrb[0].mxu0
          %v1699 = vadd.f32 %v1658, %v1698
          %v1700 = vpop.f32.mrb[0].mxu0
          %v1701 = vadd.f32 %v1660, %v1700
          %v1702 = vpop.f32.mrb[0].mxu0
          %v1703 = vpop.f32.mrb[0].mxu0
          %1704 = vdwg.mxu0
          %1705 = vmatprep.subr.bf16.mxu0 %v1234
          %1706 = vmatpush1.bf16.msra.mxu0 %v1233
          %1707 = vmatprep.subr.bf16.mxu0 %v1246
          %1708 = vmatpush1.bf16.msra.mxu0 %v1245
          %1709 = vmatprep.subr.bf16.mxu0 %v1258
          %1710 = vmatpush1.bf16.msra.mxu0 %v1257
          %1711 = vmatprep.subr.bf16.mxu0 %v1270
          %1712 = vmatpush1.bf16.msra.mxu0 %v1269
          %1713 = vmatprep.subr.bf16.mxu0 %v1282
          %1714 = vmatpush1.bf16.msra.mxu0 %v1281
          %1715 = vmatprep.subr.bf16.mxu0 %v1294
          %1716 = vmatpush1.bf16.msra.mxu0 %v1293
          %1717 = vmatprep.subr.bf16.mxu0 %v1306
          %1718 = vmatpush1.bf16.msra.mxu0 %v1305
          %1719 = vmatprep.subr.bf16.mxu0 %v1318
          %1720 = vmatpush1.bf16.msra.mxu0 %v1317
          %1721 = vmatprep.subr.bf16.mxu0 %v1330
          %1722 = vmatpush1.bf16.msra.mxu0 %v1329
          %1723 = vmatprep.subr.bf16.mxu0 %v1342
          %1724 = vmatpush1.bf16.msra.mxu0 %v1341
          %1725 = vmatprep.subr.bf16.mxu0 %v1354
          %1726 = vmatpush1.bf16.msra.mxu0 %v1353
          %1727 = vmatprep.subr.bf16.mxu0 %v1366
          %1728 = vmatpush1.bf16.msra.mxu0 %v1365
          %1729 = vmatprep.subr.bf16.mxu0 %v1378
          %1730 = vmatpush1.bf16.msra.mxu0 %v1377
          %1731 = vmatprep.subr.bf16.mxu0 %v1390
          %1732 = vmatpush1.bf16.msra.mxu0 %v1389
          %1733 = vmatprep.subr.bf16.mxu0 %v1402
          %1734 = vmatpush1.bf16.msra.mxu0 %v1401
          %1735 = vmatprep.subr.bf16.mxu0 %v1414
          %1736 = vmatpush1.bf16.msra.mxu0 %v1413
          %1737 = vmatprep.mubr.bf16.mxu0 %v1620
          %1738 = vmatmul.mubr.bf16.gmra.mrb[0].mxu0 %v1619
          %v1739 = vpop.f32.mrb[0].mxu0
          %v1740 = vadd.f32 0.0, %v1739
          %v1741 = vpop.f32.mrb[0].mxu0
          %v1742 = vadd.f32 0.0, %v1741
          %v1743 = vpop.f32.mrb[0].mxu0
          %v1744 = vpop.f32.mrb[0].mxu0
          %1745 = vdwg.mxu0
          %1746 = vmatprep.subr.bf16.mxu0 %v1426
          %1747 = vmatpush1.bf16.msra.mxu0 %v1425
          %1748 = vmatprep.subr.bf16.mxu0 %v1438
          %1749 = vmatpush1.bf16.msra.mxu0 %v1437
          %1750 = vmatprep.subr.bf16.mxu0 %v1450
          %1751 = vmatpush1.bf16.msra.mxu0 %v1449
          %1752 = vmatprep.subr.bf16.mxu0 %v1462
          %1753 = vmatpush1.bf16.msra.mxu0 %v1461
          %1754 = vmatprep.subr.bf16.mxu0 %v1474
          %1755 = vmatpush1.bf16.msra.mxu0 %v1473
          %1756 = vmatprep.subr.bf16.mxu0 %v1486
          %1757 = vmatpush1.bf16.msra.mxu0 %v1485
          %1758 = vmatprep.subr.bf16.mxu0 %v1498
          %1759 = vmatpush1.bf16.msra.mxu0 %v1497
          %1760 = vmatprep.subr.bf16.mxu0 %v1510
          %1761 = vmatpush1.bf16.msra.mxu0 %v1509
          %1762 = vmatprep.subr.bf16.mxu0 %v1522
          %1763 = vmatpush1.bf16.msra.mxu0 %v1521
          %1764 = vmatprep.subr.bf16.mxu0 %v1534
          %1765 = vmatpush1.bf16.msra.mxu0 %v1533
          %1766 = vmatprep.subr.bf16.mxu0 %v1546
          %1767 = vmatpush1.bf16.msra.mxu0 %v1545
          %1768 = vmatprep.subr.bf16.mxu0 %v1558
          %1769 = vmatpush1.bf16.msra.mxu0 %v1557
          %1770 = vmatprep.subr.bf16.mxu0 %v1570
          %1771 = vmatpush1.bf16.msra.mxu0 %v1569
          %1772 = vmatprep.subr.bf16.mxu0 %v1582
          %1773 = vmatpush1.bf16.msra.mxu0 %v1581
          %1774 = vmatprep.subr.bf16.mxu0 %v1594
          %1775 = vmatpush1.bf16.msra.mxu0 %v1593
          %1776 = vmatprep.subr.bf16.mxu0 %v1606
          %1777 = vmatpush1.bf16.msra.mxu0 %v1605
          %1778 = vmatprep.mubr.bf16.mxu0 %v1622
          %1779 = vmatmul.mubr.bf16.gmra.mrb[0].mxu0 %v1621
          %v1780 = vpop.f32.mrb[0].mxu0
          %v1781 = vadd.f32 %v1740, %v1780
          %v1782 = vpop.f32.mrb[0].mxu0
          %v1783 = vadd.f32 %v1742, %v1782
          %v1784 = vpop.f32.mrb[0].mxu0
          %v1785 = vpop.f32.mrb[0].mxu0
          %1786 = vdwg.mxu0
          %1787 = vmatprep.subr.bf16.mxu0 %v1236
          %1788 = vmatpush1.bf16.msra.mxu0 %v1235
          %1789 = vmatprep.subr.bf16.mxu0 %v1248
          %1790 = vmatpush1.bf16.msra.mxu0 %v1247
          %1791 = vmatprep.subr.bf16.mxu0 %v1260
          %1792 = vmatpush1.bf16.msra.mxu0 %v1259
          %1793 = vmatprep.subr.bf16.mxu0 %v1272
          %1794 = vmatpush1.bf16.msra.mxu0 %v1271
          %1795 = vmatprep.subr.bf16.mxu0 %v1284
          %1796 = vmatpush1.bf16.msra.mxu0 %v1283
          %1797 = vmatprep.subr.bf16.mxu0 %v1296
          %1798 = vmatpush1.bf16.msra.mxu0 %v1295
          %1799 = vmatprep.subr.bf16.mxu0 %v1308
          %1800 = vmatpush1.bf16.msra.mxu0 %v1307
          %1801 = vmatprep.subr.bf16.mxu0 %v1320
          %1802 = vmatpush1.bf16.msra.mxu0 %v1319
          %1803 = vmatprep.subr.bf16.mxu0 %v1332
          %1804 = vmatpush1.bf16.msra.mxu0 %v1331
          %1805 = vmatprep.subr.bf16.mxu0 %v1344
          %1806 = vmatpush1.bf16.msra.mxu0 %v1343
          %1807 = vmatprep.subr.bf16.mxu0 %v1356
          %1808 = vmatpush1.bf16.msra.mxu0 %v1355
          %1809 = vmatprep.subr.bf16.mxu0 %v1368
          %1810 = vmatpush1.bf16.msra.mxu0 %v1367
          %1811 = vmatprep.subr.bf16.mxu0 %v1380
          %1812 = vmatpush1.bf16.msra.mxu0 %v1379
          %1813 = vmatprep.subr.bf16.mxu0 %v1392
          %1814 = vmatpush1.bf16.msra.mxu0 %v1391
          %1815 = vmatprep.subr.bf16.mxu0 %v1404
          %1816 = vmatpush1.bf16.msra.mxu0 %v1403
          %1817 = vmatprep.subr.bf16.mxu0 %v1416
          %1818 = vmatpush1.bf16.msra.mxu0 %v1415
          %1819 = vmatprep.mubr.bf16.mxu0 %v1620
          %1820 = vmatmul.mubr.bf16.gmra.mrb[0].mxu0 %v1619
          %v1821 = vpop.f32.mrb[0].mxu0
          %v1822 = vadd.f32 0.0, %v1821
          %v1823 = vpop.f32.mrb[0].mxu0
          %v1824 = vadd.f32 0.0, %v1823
          %v1825 = vpop.f32.mrb[0].mxu0
          %v1826 = vpop.f32.mrb[0].mxu0
          %1827 = vdwg.mxu0
          %1828 = vmatprep.subr.bf16.mxu0 %v1428
          %1829 = vmatpush1.bf16.msra.mxu0 %v1427
          %1830 = vmatprep.subr.bf16.mxu0 %v1440
          %1831 = vmatpush1.bf16.msra.mxu0 %v1439
          %1832 = vmatprep.subr.bf16.mxu0 %v1452
          %1833 = vmatpush1.bf16.msra.mxu0 %v1451
          %1834 = vmatprep.subr.bf16.mxu0 %v1464
          %1835 = vmatpush1.bf16.msra.mxu0 %v1463
          %1836 = vmatprep.subr.bf16.mxu0 %v1476
          %1837 = vmatpush1.bf16.msra.mxu0 %v1475
          %1838 = vmatprep.subr.bf16.mxu0 %v1488
          %1839 = vmatpush1.bf16.msra.mxu0 %v1487
          %1840 = vmatprep.subr.bf16.mxu0 %v1500
          %1841 = vmatpush1.bf16.msra.mxu0 %v1499
          %1842 = vmatprep.subr.bf16.mxu0 %v1512
          %1843 = vmatpush1.bf16.msra.mxu0 %v1511
          %1844 = vmatprep.subr.bf16.mxu0 %v1524
          %1845 = vmatpush1.bf16.msra.mxu0 %v1523
          %1846 = vmatprep.subr.bf16.mxu0 %v1536
          %1847 = vmatpush1.bf16.msra.mxu0 %v1535
          %1848 = vmatprep.subr.bf16.mxu0 %v1548
          %1849 = vmatpush1.bf16.msra.mxu0 %v1547
          %1850 = vmatprep.subr.bf16.mxu0 %v1560
          %1851 = vmatpush1.bf16.msra.mxu0 %v1559
          %1852 = vmatprep.subr.bf16.mxu0 %v1572
          %1853 = vmatpush1.bf16.msra.mxu0 %v1571
          %1854 = vmatprep.subr.bf16.mxu0 %v1584
          %1855 = vmatpush1.bf16.msra.mxu0 %v1583
          %1856 = vmatprep.subr.bf16.mxu0 %v1596
          %1857 = vmatpush1.bf16.msra.mxu0 %v1595
          %1858 = vmatprep.subr.bf16.mxu0 %v1608
          %1859 = vmatpush1.bf16.msra.mxu0 %v1607
          %1860 = vmatprep.mubr.bf16.mxu0 %v1622
          %1861 = vmatmul.mubr.bf16.gmra.mrb[0].mxu0 %v1621
          %v1862 = vpop.f32.mrb[0].mxu0
          %v1863 = vadd.f32 %v1822, %v1862
          %v1864 = vpop.f32.mrb[0].mxu0
          %v1865 = vadd.f32 %v1824, %v1864
          %v1866 = vpop.f32.mrb[0].mxu0
          %v1867 = vpop.f32.mrb[0].mxu0
          %1868 = vdwg.mxu0
          %1869 = vmatprep.subr.bf16.mxu0 %v1238
          %1870 = vmatpush1.bf16.msra.mxu0 %v1237
          %1871 = vmatprep.subr.bf16.mxu0 %v1250
          %1872 = vmatpush1.bf16.msra.mxu0 %v1249
          %1873 = vmatprep.subr.bf16.mxu0 %v1262
          %1874 = vmatpush1.bf16.msra.mxu0 %v1261
          %1875 = vmatprep.subr.bf16.mxu0 %v1274
          %1876 = vmatpush1.bf16.msra.mxu0 %v1273
          %1877 = vmatprep.subr.bf16.mxu0 %v1286
          %1878 = vmatpush1.bf16.msra.mxu0 %v1285
          %1879 = vmatprep.subr.bf16.mxu0 %v1298
          %1880 = vmatpush1.bf16.msra.mxu0 %v1297
          %1881 = vmatprep.subr.bf16.mxu0 %v1310
          %1882 = vmatpush1.bf16.msra.mxu0 %v1309
          %1883 = vmatprep.subr.bf16.mxu0 %v1322
          %1884 = vmatpush1.bf16.msra.mxu0 %v1321
          %1885 = vmatprep.subr.bf16.mxu0 %v1334
          %1886 = vmatpush1.bf16.msra.mxu0 %v1333
          %1887 = vmatprep.subr.bf16.mxu0 %v1346
          %1888 = vmatpush1.bf16.msra.mxu0 %v1345
          %1889 = vmatprep.subr.bf16.mxu0 %v1358
          %1890 = vmatpush1.bf16.msra.mxu0 %v1357
          %1891 = vmatprep.subr.bf16.mxu0 %v1370
          %1892 = vmatpush1.bf16.msra.mxu0 %v1369
          %1893 = vmatprep.subr.bf16.mxu0 %v1382
          %1894 = vmatpush1.bf16.msra.mxu0 %v1381
          %1895 = vmatprep.subr.bf16.mxu0 %v1394
          %1896 = vmatpush1.bf16.msra.mxu0 %v1393
          %1897 = vmatprep.subr.bf16.mxu0 %v1406
          %1898 = vmatpush1.bf16.msra.mxu0 %v1405
          %1899 = vmatprep.subr.bf16.mxu0 %v1418
          %1900 = vmatpush1.bf16.msra.mxu0 %v1417
          %1901 = vmatprep.mubr.bf16.mxu0 %v1620
          %1902 = vmatmul.mubr.bf16.gmra.mrb[0].mxu0 %v1619
          %v1903 = vpop.f32.mrb[0].mxu0
          %v1904 = vadd.f32 0.0, %v1903
          %v1905 = vpop.f32.mrb[0].mxu0
          %v1906 = vadd.f32 0.0, %v1905
          %v1907 = vpop.f32.mrb[0].mxu0
          %v1908 = vpop.f32.mrb[0].mxu0
          %1909 = vdwg.mxu0
          %1910 = vmatprep.subr.bf16.mxu0 %v1430
          %1911 = vmatpush1.bf16.msra.mxu0 %v1429
          %1912 = vmatprep.subr.bf16.mxu0 %v1442
          %1913 = vmatpush1.bf16.msra.mxu0 %v1441
          %1914 = vmatprep.subr.bf16.mxu0 %v1454
          %1915 = vmatpush1.bf16.msra.mxu0 %v1453
          %1916 = vmatprep.subr.bf16.mxu0 %v1466
          %1917 = vmatpush1.bf16.msra.mxu0 %v1465
          %1918 = vmatprep.subr.bf16.mxu0 %v1478
          %1919 = vmatpush1.bf16.msra.mxu0 %v1477
          %1920 = vmatprep.subr.bf16.mxu0 %v1490
          %1921 = vmatpush1.bf16.msra.mxu0 %v1489
          %1922 = vmatprep.subr.bf16.mxu0 %v1502
          %1923 = vmatpush1.bf16.msra.mxu0 %v1501
          %1924 = vmatprep.subr.bf16.mxu0 %v1514
          %1925 = vmatpush1.bf16.msra.mxu0 %v1513
          %1926 = vmatprep.subr.bf16.mxu0 %v1526
          %1927 = vmatpush1.bf16.msra.mxu0 %v1525
          %1928 = vmatprep.subr.bf16.mxu0 %v1538
          %1929 = vmatpush1.bf16.msra.mxu0 %v1537
          %1930 = vmatprep.subr.bf16.mxu0 %v1550
          %1931 = vmatpush1.bf16.msra.mxu0 %v1549
          %1932 = vmatprep.subr.bf16.mxu0 %v1562
          %1933 = vmatpush1.bf16.msra.mxu0 %v1561
          %1934 = vmatprep.subr.bf16.mxu0 %v1574
          %1935 = vmatpush1.bf16.msra.mxu0 %v1573
          %1936 = vmatprep.subr.bf16.mxu0 %v1586
          %1937 = vmatpush1.bf16.msra.mxu0 %v1585
          %1938 = vmatprep.subr.bf16.mxu0 %v1598
          %1939 = vmatpush1.bf16.msra.mxu0 %v1597
          %1940 = vmatprep.subr.bf16.mxu0 %v1610
          %1941 = vmatpush1.bf16.msra.mxu0 %v1609
          %1942 = vmatprep.mubr.bf16.mxu0 %v1622
          %1943 = vmatmul.mubr.bf16.gmra.mrb[0].mxu0 %v1621
          %v1944 = vpop.f32.mrb[0].mxu0
          %v1945 = vadd.f32 %v1904, %v1944
          %v1946 = vpop.f32.mrb[0].mxu0
          %v1947 = vadd.f32 %v1906, %v1946
          %v1948 = vpop.f32.mrb[0].mxu0
          %v1949 = vpop.f32.mrb[0].mxu0
          %1950 = vdwg.mxu0
          %1951 = vmatprep.subr.bf16.mxu0 %v1240
          %1952 = vmatpush1.bf16.msra.mxu0 %v1239
          %1953 = vmatprep.subr.bf16.mxu0 %v1252
          %1954 = vmatpush1.bf16.msra.mxu0 %v1251
          %1955 = vmatprep.subr.bf16.mxu0 %v1264
          %1956 = vmatpush1.bf16.msra.mxu0 %v1263
          %1957 = vmatprep.subr.bf16.mxu0 %v1276
          %1958 = vmatpush1.bf16.msra.mxu0 %v1275
          %1959 = vmatprep.subr.bf16.mxu0 %v1288
          %1960 = vmatpush1.bf16.msra.mxu0 %v1287
          %1961 = vmatprep.subr.bf16.mxu0 %v1300
          %1962 = vmatpush1.bf16.msra.mxu0 %v1299
          %1963 = vmatprep.subr.bf16.mxu0 %v1312
          %1964 = vmatpush1.bf16.msra.mxu0 %v1311
          %1965 = vmatprep.subr.bf16.mxu0 %v1324
          %1966 = vmatpush1.bf16.msra.mxu0 %v1323
          %1967 = vmatprep.subr.bf16.mxu0 %v1336
          %1968 = vmatpush1.bf16.msra.mxu0 %v1335
          %1969 = vmatprep.subr.bf16.mxu0 %v1348
          %1970 = vmatpush1.bf16.msra.mxu0 %v1347
          %1971 = vmatprep.subr.bf16.mxu0 %v1360
          %1972 = vmatpush1.bf16.msra.mxu0 %v1359
          %1973 = vmatprep.subr.bf16.mxu0 %v1372
          %1974 = vmatpush1.bf16.msra.mxu0 %v1371
          %1975 = vmatprep.subr.bf16.mxu0 %v1384
          %1976 = vmatpush1.bf16.msra.mxu0 %v1383
          %1977 = vmatprep.subr.bf16.mxu0 %v1396
          %1978 = vmatpush1.bf16.msra.mxu0 %v1395
          %1979 = vmatprep.subr.bf16.mxu0 %v1408
          %1980 = vmatpush1.bf16.msra.mxu0 %v1407
          %1981 = vmatprep.subr.bf16.mxu0 %v1420
          %1982 = vmatpush1.bf16.msra.mxu0 %v1419
          %1983 = vmatprep.mubr.bf16.mxu0 %v1620
          %1984 = vmatmul.mubr.bf16.gmra.mrb[0].mxu0 %v1619
          %v1985 = vpop.f32.mrb[0].mxu0
          %v1986 = vadd.f32 0.0, %v1985
          %v1987 = vpop.f32.mrb[0].mxu0
          %v1988 = vadd.f32 0.0, %v1987
          %v1989 = vpop.f32.mrb[0].mxu0
          %v1990 = vpop.f32.mrb[0].mxu0
          %1991 = vdwg.mxu0
          %1992 = vmatprep.subr.bf16.mxu0 %v1432
          %1993 = vmatpush1.bf16.msra.mxu0 %v1431
          %1994 = vmatprep.subr.bf16.mxu0 %v1444
          %1995 = vmatpush1.bf16.msra.mxu0 %v1443
          %1996 = vmatprep.subr.bf16.mxu0 %v1456
          %1997 = vmatpush1.bf16.msra.mxu0 %v1455
          %1998 = vmatprep.subr.bf16.mxu0 %v1468
          %1999 = vmatpush1.bf16.msra.mxu0 %v1467
          %2000 = vmatprep.subr.bf16.mxu0 %v1480
          %2001 = vmatpush1.bf16.msra.mxu0 %v1479
          %2002 = vmatprep.subr.bf16.mxu0 %v1492
          %2003 = vmatpush1.bf16.msra.mxu0 %v1491
          %2004 = vmatprep.subr.bf16.mxu0 %v1504
          %2005 = vmatpush1.bf16.msra.mxu0 %v1503
          %2006 = vmatprep.subr.bf16.mxu0 %v1516
          %2007 = vmatpush1.bf16.msra.mxu0 %v1515
          %2008 = vmatprep.subr.bf16.mxu0 %v1528
          %2009 = vmatpush1.bf16.msra.mxu0 %v1527
          %2010 = vmatprep.subr.bf16.mxu0 %v1540
          %2011 = vmatpush1.bf16.msra.mxu0 %v1539
          %2012 = vmatprep.subr.bf16.mxu0 %v1552
          %2013 = vmatpush1.bf16.msra.mxu0 %v1551
          %2014 = vmatprep.subr.bf16.mxu0 %v1564
          %2015 = vmatpush1.bf16.msra.mxu0 %v1563
          %2016 = vmatprep.subr.bf16.mxu0 %v1576
          %2017 = vmatpush1.bf16.msra.mxu0 %v1575
          %2018 = vmatprep.subr.bf16.mxu0 %v1588
          %2019 = vmatpush1.bf16.msra.mxu0 %v1587
          %2020 = vmatprep.subr.bf16.mxu0 %v1600
          %2021 = vmatpush1.bf16.msra.mxu0 %v1599
          %2022 = vmatprep.subr.bf16.mxu0 %v1612
          %2023 = vmatpush1.bf16.msra.mxu0 %v1611
          %2024 = vmatprep.mubr.bf16.mxu0 %v1622
          %2025 = vmatmul.mubr.bf16.gmra.mrb[0].mxu0 %v1621
          %v2026 = vpop.f32.mrb[0].mxu0
          %v2027 = vadd.f32 %v1986, %v2026
          %v2028 = vpop.f32.mrb[0].mxu0
          %v2029 = vadd.f32 %v1988, %v2028
          %v2030 = vpop.f32.mrb[0].mxu0
          %v2031 = vpop.f32.mrb[0].mxu0
          %2032 = vdwg.mxu0
          %2033 = vmatprep.subr.bf16.mxu0 %v1242
          %2034 = vmatpush1.bf16.msra.mxu0 %v1241
          %2035 = vmatprep.subr.bf16.mxu0 %v1254
          %2036 = vmatpush1.bf16.msra.mxu0 %v1253
          %2037 = vmatprep.subr.bf16.mxu0 %v1266
          %2038 = vmatpush1.bf16.msra.mxu0 %v1265
          %2039 = vmatprep.subr.bf16.mxu0 %v1278
          %2040 = vmatpush1.bf16.msra.mxu0 %v1277
          %2041 = vmatprep.subr.bf16.mxu0 %v1290
          %2042 = vmatpush1.bf16.msra.mxu0 %v1289
          %2043 = vmatprep.subr.bf16.mxu0 %v1302
          %2044 = vmatpush1.bf16.msra.mxu0 %v1301
          %2045 = vmatprep.subr.bf16.mxu0 %v1314
          %2046 = vmatpush1.bf16.msra.mxu0 %v1313
          %2047 = vmatprep.subr.bf16.mxu0 %v1326
          %2048 = vmatpush1.bf16.msra.mxu0 %v1325
          %2049 = vmatprep.subr.bf16.mxu0 %v1338
          %2050 = vmatpush1.bf16.msra.mxu0 %v1337
          %2051 = vmatprep.subr.bf16.mxu0 %v1350
          %2052 = vmatpush1.bf16.msra.mxu0 %v1349
          %2053 = vmatprep.subr.bf16.mxu0 %v1362
          %2054 = vmatpush1.bf16.msra.mxu0 %v1361
          %2055 = vmatprep.subr.bf16.mxu0 %v1374
          %2056 = vmatpush1.bf16.msra.mxu0 %v1373
          %2057 = vmatprep.subr.bf16.mxu0 %v1386
          %2058 = vmatpush1.bf16.msra.mxu0 %v1385
          %2059 = vmatprep.subr.bf16.mxu0 %v1398
          %2060 = vmatpush1.bf16.msra.mxu0 %v1397
          %2061 = vmatprep.subr.bf16.mxu0 %v1410
          %2062 = vmatpush1.bf16.msra.mxu0 %v1409
          %2063 = vmatprep.subr.bf16.mxu0 %v1422
          %2064 = vmatpush1.bf16.msra.mxu0 %v1421
          %2065 = vmatprep.mubr.bf16.mxu0 %v1620
          %2066 = vmatmul.mubr.bf16.gmra.mrb[0].mxu0 %v1619
          %v2067 = vpop.f32.mrb[0].mxu0
          %v2068 = vadd.f32 0.0, %v2067
          %v2069 = vpop.f32.mrb[0].mxu0
          %v2070 = vadd.f32 0.0, %v2069
          %v2071 = vpop.f32.mrb[0].mxu0
          %v2072 = vpop.f32.mrb[0].mxu0
          %2073 = vdwg.mxu0
          %2074 = vmatprep.subr.bf16.mxu0 %v1434
          %2075 = vmatpush1.bf16.msra.mxu0 %v1433
          %2076 = vmatprep.subr.bf16.mxu0 %v1446
          %2077 = vmatpush1.bf16.msra.mxu0 %v1445
          %2078 = vmatprep.subr.bf16.mxu0 %v1458
          %2079 = vmatpush1.bf16.msra.mxu0 %v1457
          %2080 = vmatprep.subr.bf16.mxu0 %v1470
          %2081 = vmatpush1.bf16.msra.mxu0 %v1469
          %2082 = vmatprep.subr.bf16.mxu0 %v1482
          %2083 = vmatpush1.bf16.msra.mxu0 %v1481
          %2084 = vmatprep.subr.bf16.mxu0 %v1494
          %2085 = vmatpush1.bf16.msra.mxu0 %v1493
          %2086 = vmatprep.subr.bf16.mxu0 %v1506
          %2087 = vmatpush1.bf16.msra.mxu0 %v1505
          %2088 = vmatprep.subr.bf16.mxu0 %v1518
          %2089 = vmatpush1.bf16.msra.mxu0 %v1517
          %2090 = vmatprep.subr.bf16.mxu0 %v1530
          %2091 = vmatpush1.bf16.msra.mxu0 %v1529
          %2092 = vmatprep.subr.bf16.mxu0 %v1542
          %2093 = vmatpush1.bf16.msra.mxu0 %v1541
          %2094 = vmatprep.subr.bf16.mxu0 %v1554
          %2095 = vmatpush1.bf16.msra.mxu0 %v1553
          %2096 = vmatprep.subr.bf16.mxu0 %v1566
          %2097 = vmatpush1.bf16.msra.mxu0 %v1565
          %2098 = vmatprep.subr.bf16.mxu0 %v1578
          %2099 = vmatpush1.bf16.msra.mxu0 %v1577
          %2100 = vmatprep.subr.bf16.mxu0 %v1590
          %2101 = vmatpush1.bf16.msra.mxu0 %v1589
          %2102 = vmatprep.subr.bf16.mxu0 %v1602
          %2103 = vmatpush1.bf16.msra.mxu0 %v1601
          %2104 = vmatprep.subr.bf16.mxu0 %v1614
          %2105 = vmatpush1.bf16.msra.mxu0 %v1613
          %2106 = vmatprep.mubr.bf16.mxu0 %v1622
          %2107 = vmatmul.mubr.bf16.gmra.mrb[0].mxu0 %v1621
          %v2108 = vpop.f32.mrb[0].mxu0
          %v2109 = vadd.f32 %v2068, %v2108
          %v2110 = vpop.f32.mrb[0].mxu0
          %v2111 = vadd.f32 %v2070, %v2110
          %v2112 = vpop.f32.mrb[0].mxu0
          %v2113 = vpop.f32.mrb[0].mxu0
          %2114 = vdwg.mxu0
          %v2115 = vld [vmem:[%s472] sm:$0xff]
          %v2116 = vld [vmem:[%s472 + $0x8] sm:$0xf]
          %v2119 = vlaneseq
          %v2120 = vshrl.u32 %v2119, 7
          %v2121 = vsub.s32 0, %v2120
          %v2122 = vrot.slane %v2115, %v2121
          %v2123 = vlaneseq
          %v2124 = vshrl.u32 %v2123, 7
          %v2125 = vsub.s32 1, %v2124
          %v2126 = vrot.slane %v2115, %v2125
          %v2127 = vlaneseq
          %v2128 = vshrl.u32 %v2127, 7
          %v2129 = vsub.s32 2, %v2128
          %v2130 = vrot.slane %v2115, %v2129
          %v2131 = vlaneseq
          %v2132 = vshrl.u32 %v2131, 7
          %v2133 = vsub.s32 3, %v2132
          %v2134 = vrot.slane %v2115, %v2133
          %v2135 = vlaneseq
          %v2136 = vshrl.u32 %v2135, 7
          %v2137 = vsub.s32 4, %v2136
          %v2138 = vrot.slane %v2115, %v2137
          %v2139 = vlaneseq
          %v2140 = vshrl.u32 %v2139, 7
          %v2141 = vsub.s32 5, %v2140
          %v2142 = vrot.slane %v2115, %v2141
          %v2143 = vlaneseq
          %v2144 = vshrl.u32 %v2143, 7
          %v2145 = vsub.s32 6, %v2144
          %v2146 = vrot.slane %v2115, %v2145
          %v2147 = vlaneseq
          %v2148 = vshrl.u32 %v2147, 7
          %v2149 = vsub.s32 7, %v2148
          %v2150 = vrot.slane %v2115, %v2149
          %v2151 = vlaneseq
          %v2152 = vshrl.u32 %v2151, 7
          %v2153 = vsub.s32 0, %v2152
          %v2154 = vrot.slane %v2116, %v2153
          %v2155 = vlaneseq
          %v2156 = vshrl.u32 %v2155, 7
          %v2157 = vsub.s32 1, %v2156
          %v2158 = vrot.slane %v2116, %v2157
          %v2159 = vlaneseq
          %v2160 = vshrl.u32 %v2159, 7
          %v2161 = vsub.s32 2, %v2160
          %v2162 = vrot.slane %v2116, %v2161
          %v2163 = vlaneseq
          %v2164 = vshrl.u32 %v2163, 7
          %v2165 = vsub.s32 3, %v2164
          %v2166 = vrot.slane %v2116, %v2165
          %v2179 = vmul.f32 %v1699, %v2122
          %v2180 = vmul.f32 %v1701, %v2126
          %v2181 = vmul.f32 %v1781, %v2130
          %v2182 = vmul.f32 %v1783, %v2134
          %v2183 = vmul.f32 %v1863, %v2138
          %v2184 = vmul.f32 %v1865, %v2142
          %v2185 = vmul.f32 %v1945, %v2146
          %v2186 = vmul.f32 %v1947, %v2150
          %v2187 = vmul.f32 %v2027, %v2154
          %v2188 = vmul.f32 %v2029, %v2158
          %v2189 = vmul.f32 %v2109, %v2162
          %v2190 = vmul.f32 %v2111, %v2166
          %v2191 = vld [vmem:[%s481] sm:$0xff]
          %v2192 = vld [vmem:[%s481 + $0x8] sm:$0xf]
          %v2195 = vlaneseq
          %v2196 = vshrl.u32 %v2195, 7
          %v2197 = vsub.s32 0, %v2196
          %v2198 = vrot.slane %v2191, %v2197
          %v2199 = vlaneseq
          %v2200 = vshrl.u32 %v2199, 7
          %v2201 = vsub.s32 1, %v2200
          %v2202 = vrot.slane %v2191, %v2201
          %v2203 = vlaneseq
          %v2204 = vshrl.u32 %v2203, 7
          %v2205 = vsub.s32 2, %v2204
          %v2206 = vrot.slane %v2191, %v2205
          %v2207 = vlaneseq
          %v2208 = vshrl.u32 %v2207, 7
          %v2209 = vsub.s32 3, %v2208
          %v2210 = vrot.slane %v2191, %v2209
          %v2211 = vlaneseq
          %v2212 = vshrl.u32 %v2211, 7
          %v2213 = vsub.s32 4, %v2212
          %v2214 = vrot.slane %v2191, %v2213
          %v2215 = vlaneseq
          %v2216 = vshrl.u32 %v2215, 7
          %v2217 = vsub.s32 5, %v2216
          %v2218 = vrot.slane %v2191, %v2217
          %v2219 = vlaneseq
          %v2220 = vshrl.u32 %v2219, 7
          %v2221 = vsub.s32 6, %v2220
          %v2222 = vrot.slane %v2191, %v2221
          %v2223 = vlaneseq
          %v2224 = vshrl.u32 %v2223, 7
          %v2225 = vsub.s32 7, %v2224
          %v2226 = vrot.slane %v2191, %v2225
          %v2227 = vlaneseq
          %v2228 = vshrl.u32 %v2227, 7
          %v2229 = vsub.s32 0, %v2228
          %v2230 = vrot.slane %v2192, %v2229
          %v2231 = vlaneseq
          %v2232 = vshrl.u32 %v2231, 7
          %v2233 = vsub.s32 1, %v2232
          %v2234 = vrot.slane %v2192, %v2233
          %v2235 = vlaneseq
          %v2236 = vshrl.u32 %v2235, 7
          %v2237 = vsub.s32 2, %v2236
          %v2238 = vrot.slane %v2192, %v2237
          %v2239 = vlaneseq
          %v2240 = vshrl.u32 %v2239, 7
          %v2241 = vsub.s32 3, %v2240
          %v2242 = vrot.slane %v2192, %v2241
          %v2255 = vadd.f32 %v2179, %v2198
          %v2256 = vadd.f32 %v2180, %v2202
          %v2257 = vadd.f32 %v2181, %v2206
          %v2258 = vadd.f32 %v2182, %v2210
          %v2259 = vadd.f32 %v2183, %v2214
          %v2260 = vadd.f32 %v2184, %v2218
          %v2261 = vadd.f32 %v2185, %v2222
          %v2262 = vadd.f32 %v2186, %v2226
          %v2263 = vadd.f32 %v2187, %v2230
          %v2264 = vadd.f32 %v2188, %v2234
          %v2265 = vadd.f32 %v2189, %v2238
          %v2266 = vadd.f32 %v2190, %v2242
          %v2267 = vxor.u32 %v2255, 2147483648
          %v2268 = vxor.u32 %v2256, 2147483648
          %v2269 = vxor.u32 %v2257, 2147483648
          %v2270 = vxor.u32 %v2258, 2147483648
          %v2271 = vmul.f32 %v2267, 1.442695
          %v2272 = vpow.pop %v2271
          %v2273 = vmul.f32 %v2268, 1.442695
          %v2274 = vpow.pop %v2273
          %v2275 = vmul.f32 %v2269, 1.442695
          %v2276 = vpow.pop %v2275
          %v2277 = vmul.f32 %v2270, 1.442695
          %v2278 = vpow.pop %v2277
          %v2279 = vadd.f32 %v2272, 1.0
          %v2280 = vadd.f32 %v2274, 1.0
          %v2281 = vadd.f32 %v2276, 1.0
          %v2282 = vadd.f32 %v2278, 1.0
          %v2283 = vrcp.pop %v2279
          %v2284 = vmul.f32 1.0, %v2283
          %v2285 = vrcp.pop %v2280
          %v2286 = vmul.f32 1.0, %v2285
          %v2287 = vrcp.pop %v2281
          %v2288 = vmul.f32 1.0, %v2287
          %v2289 = vrcp.pop %v2282
          %v2290 = vmul.f32 1.0, %v2289
          %v2291 = vtanh.pop %v2259
          %v2292 = vtanh.pop %v2260
          %v2293 = vtanh.pop %v2261
          %v2294 = vtanh.pop %v2262
          %v2295 = vxor.u32 %v2263, 2147483648
          %v2296 = vxor.u32 %v2264, 2147483648
          %v2297 = vxor.u32 %v2265, 2147483648
          %v2298 = vxor.u32 %v2266, 2147483648
          %v2299 = vmul.f32 %v2295, 1.442695
          %v2300 = vpow.pop %v2299
          %v2301 = vmul.f32 %v2296, 1.442695
          %v2302 = vpow.pop %v2301
          %v2303 = vmul.f32 %v2297, 1.442695
          %v2304 = vpow.pop %v2303
          %v2305 = vmul.f32 %v2298, 1.442695
          %v2306 = vpow.pop %v2305
          %v2307 = vadd.f32 %v2300, 1.0
          %v2308 = vadd.f32 %v2302, 1.0
          %v2309 = vadd.f32 %v2304, 1.0
          %v2310 = vadd.f32 %v2306, 1.0
          %v2311 = vrcp.pop %v2307
          %v2312 = vmul.f32 1.0, %v2311
          %v2313 = vrcp.pop %v2308
          %v2314 = vmul.f32 1.0, %v2313
          %v2315 = vrcp.pop %v2309
          %v2316 = vmul.f32 1.0, %v2315
          %v2317 = vrcp.pop %v2310
          %v2318 = vmul.f32 1.0, %v2317
          %v2319 = vmul.f32 %v2284, %v2291
          %v2320 = vmul.f32 %v2286, %v2292
          %v2321 = vmul.f32 %v2288, %v2293
          %v2322 = vmul.f32 %v2290, %v2294
          %v2323 = vtanh.pop %v2319
          %v2324 = vtanh.pop %v2320
          %v2325 = vtanh.pop %v2321
          %v2326 = vtanh.pop %v2322
          %v2327 = vmul.f32 %v2312, %v2323
          %v2328 = vmul.f32 %v2314, %v2324
          %v2329 = vmul.f32 %v2316, %v2325
          %v2330 = vmul.f32 %v2318, %v2326
          %2331 = vst [vmem:[#allocation2] sm:$0xff] %v2327
          %2332 = vst [vmem:[#allocation2 + $0x8] sm:$0xff] %v2328
          %2333 = vst [vmem:[#allocation2 + $0x10] sm:$0xff] %v2329
          %2334 = vst [vmem:[#allocation2 + $0x18] sm:$0xff] %v2330
        $region108: #{model_forward.1} parent=59 // pred_fallthru
          _
        %p2335 = scmp.eq.s32.totalorder %s26, 3
        // Predicated region
        $region109: #{model_forward.1} parent=59 // pred_check
          %p2336 = pneg %p2335
        $region110: #{model_forward.1} parent=59 // pred_check_branch
          %2338 = sbr.rel (%p2336) target = $region112
        $region111: #{model_forward.1} parent=59 // pred_region
          %v2339 = vld [vmem:[#allocation2] sm:$0xff]
          %v2340 = vld [vmem:[#allocation2 + $0x8] sm:$0xff]
          %v2341 = vld [vmem:[#allocation2 + $0x10] sm:$0xff]
          %v2342 = vld [vmem:[#allocation2 + $0x18] sm:$0xff]
          %v2343 = vrot.slane %v2339, 4
          %v2344 = vadd.f32 %v2339, %v2343
          %v2345 = vrot.slane %v2344, 2
          %v2346 = vadd.f32 %v2344, %v2345
          %v2347 = vrot.slane %v2346, 1
          %v2348 = vadd.f32 %v2346, %v2347
          %v2349 = vrot.slane %v2340, 4
          %v2350 = vadd.f32 %v2340, %v2349
          %v2351 = vrot.slane %v2350, 2
          %v2352 = vadd.f32 %v2350, %v2351
          %v2353 = vrot.slane %v2352, 1
          %v2354 = vadd.f32 %v2352, %v2353
          %v2355 = vrot.slane %v2341, 4
          %v2356 = vadd.f32 %v2341, %v2355
          %v2357 = vrot.slane %v2356, 2
          %v2358 = vadd.f32 %v2356, %v2357
          %v2359 = vrot.slane %v2358, 1
          %v2360 = vadd.f32 %v2358, %v2359
          %v2361 = vrot.slane %v2342, 4
          %v2362 = vadd.f32 %v2342, %v2361
          %v2363 = vrot.slane %v2362, 2
          %v2364 = vadd.f32 %v2362, %v2363
          %v2365 = vrot.slane %v2364, 1
          %v2366 = vadd.f32 %v2364, %v2365
          %v2367 = vrcp.pop 8.0
          %v2368 = vmul.f32 %v2348, %v2367
          %v2369 = vmul.f32 %v2354, %v2367
          %v2370 = vmul.f32 %v2360, %v2367
          %v2371 = vmul.f32 %v2366, %v2367
          %v2372 = vsub.f32 %v2339, %v2368
          %v2373 = vsub.f32 %v2340, %v2369
          %v2374 = vsub.f32 %v2341, %v2370
          %v2375 = vsub.f32 %v2342, %v2371
          %v2376 = vmul.f32 %v2372, %v2372
          %v2377 = vmul.f32 %v2373, %v2373
          %v2378 = vmul.f32 %v2374, %v2374
          %v2379 = vmul.f32 %v2375, %v2375
          %v2380 = vrot.slane %v2376, 4
          %v2381 = vadd.f32 %v2376, %v2380
          %v2382 = vrot.slane %v2381, 2
          %v2383 = vadd.f32 %v2381, %v2382
          %v2384 = vrot.slane %v2383, 1
          %v2385 = vadd.f32 %v2383, %v2384
          %v2386 = vrot.slane %v2377, 4
          %v2387 = vadd.f32 %v2377, %v2386
          %v2388 = vrot.slane %v2387, 2
          %v2389 = vadd.f32 %v2387, %v2388
          %v2390 = vrot.slane %v2389, 1
          %v2391 = vadd.f32 %v2389, %v2390
          %v2392 = vrot.slane %v2378, 4
          %v2393 = vadd.f32 %v2378, %v2392
          %v2394 = vrot.slane %v2393, 2
          %v2395 = vadd.f32 %v2393, %v2394
          %v2396 = vrot.slane %v2395, 1
          %v2397 = vadd.f32 %v2395, %v2396
          %v2398 = vrot.slane %v2379, 4
          %v2399 = vadd.f32 %v2379, %v2398
          %v2400 = vrot.slane %v2399, 2
          %v2401 = vadd.f32 %v2399, %v2400
          %v2402 = vrot.slane %v2401, 1
          %v2403 = vadd.f32 %v2401, %v2402
          %v2404 = vmul.f32 %v2385, %v2367
          %v2405 = vmul.f32 %v2391, %v2367
          %v2406 = vmul.f32 %v2397, %v2367
          %v2407 = vmul.f32 %v2403, %v2367
          %v2408 = vadd.f32 %v2404, 1e-05
          %v2409 = vadd.f32 %v2405, 1e-05
          %v2410 = vadd.f32 %v2406, 1e-05
          %v2411 = vadd.f32 %v2407, 1e-05
          %v2412 = vrsqrt.pop %v2408
          %v2413 = vrsqrt.pop %v2409
          %v2414 = vrsqrt.pop %v2410
          %v2415 = vrsqrt.pop %v2411
          %v2416 = vmul.f32 %v2372, %v2412
          %v2417 = vmul.f32 %v2373, %v2413
          %v2418 = vmul.f32 %v2374, %v2414
          %v2419 = vmul.f32 %v2375, %v2415
          %v2420 = vld [vmem:[#allocation11] sm:$0xf]
          %v2422 = vlaneseq
          %v2423 = vshrl.u32 %v2422, 7
          %v2424 = vsub.s32 0, %v2423
          %v2425 = vrot.slane %v2420, %v2424
          %v2426 = vlaneseq
          %v2427 = vshrl.u32 %v2426, 7
          %v2428 = vsub.s32 1, %v2427
          %v2429 = vrot.slane %v2420, %v2428
          %v2430 = vlaneseq
          %v2431 = vshrl.u32 %v2430, 7
          %v2432 = vsub.s32 2, %v2431
          %v2433 = vrot.slane %v2420, %v2432
          %v2434 = vlaneseq
          %v2435 = vshrl.u32 %v2434, 7
          %v2436 = vsub.s32 3, %v2435
          %v2437 = vrot.slane %v2420, %v2436
          %v2442 = vmul.f32 %v2416, %v2425
          %v2443 = vmul.f32 %v2417, %v2429
          %v2444 = vmul.f32 %v2418, %v2433
          %v2445 = vmul.f32 %v2419, %v2437
          %v2446 = vld [vmem:[#allocation12] sm:$0xf]
          %v2448 = vlaneseq
          %v2449 = vshrl.u32 %v2448, 7
          %v2450 = vsub.s32 0, %v2449
          %v2451 = vrot.slane %v2446, %v2450
          %v2452 = vlaneseq
          %v2453 = vshrl.u32 %v2452, 7
          %v2454 = vsub.s32 1, %v2453
          %v2455 = vrot.slane %v2446, %v2454
          %v2456 = vlaneseq
          %v2457 = vshrl.u32 %v2456, 7
          %v2458 = vsub.s32 2, %v2457
          %v2459 = vrot.slane %v2446, %v2458
          %v2460 = vlaneseq
          %v2461 = vshrl.u32 %v2460, 7
          %v2462 = vsub.s32 3, %v2461
          %v2463 = vrot.slane %v2446, %v2462
          %v2468 = vadd.f32 %v2442, %v2451
          %v2469 = vadd.f32 %v2443, %v2455
          %v2470 = vadd.f32 %v2444, %v2459
          %v2471 = vadd.f32 %v2445, %v2463
          %v2472 = vmax.f32 %v2468, %v2469
          %v2473 = vmax.f32 %v2470, %v2471
          %v2474 = vmax.f32 %v2472, %v2473
          %2475 = vmax.xlane.f32.xlu0 %v2474
          %v2476 = vpop.xlane.xlu0 %2475
          %v2477 = vsub.f32 %v2468, %v2476
          %v2478 = vsub.f32 %v2469, %v2476
          %v2479 = vsub.f32 %v2470, %v2476
          %v2480 = vsub.f32 %v2471, %v2476
          %v2481 = vmul.f32 %v2477, 1.442695
          %v2482 = vpow.pop %v2481
          %v2483 = vmul.f32 %v2478, 1.442695
          %v2484 = vpow.pop %v2483
          %v2485 = vmul.f32 %v2479, 1.442695
          %v2486 = vpow.pop %v2485
          %v2487 = vmul.f32 %v2480, 1.442695
          %v2488 = vpow.pop %v2487
          %v2489 = vadd.f32 %v2482, %v2484
          %v2490 = vadd.f32 %v2489, %v2486
          %v2491 = vadd.f32 %v2490, %v2488
          %2492 = vadd.xlane.f32.xlu0 %v2491
          %v2493 = vpop.xlane.xlu0 %2492
          %v2494 = vrcp.pop %v2493
          %v2495 = vmul.f32 %v2482, %v2494
          %v2496 = vmul.f32 %v2484, %v2494
          %v2497 = vmul.f32 %v2486, %v2494
          %v2498 = vmul.f32 %v2488, %v2494
          %v2499 = vpack.c.bf16 %v2495, %v2495
          %v2500 = vpack.c.bf16 %v2496, %v2496
          %v2501 = vpack.c.bf16 %v2497, %v2497
          %v2502 = vpack.c.bf16 %v2498, %v2498
          %v2503 = vld [vmem:[#allocation14] sm:$0xff]
          %v2504 = vld [vmem:[#allocation14 + $0x8] sm:$0xff]
          %v2505 = vld [vmem:[#allocation14 + $0x10] sm:$0xff]
          %v2506 = vld [vmem:[#allocation14 + $0x18] sm:$0xff]
          %v2507 = vld [vmem:[#allocation14 + $0x20] sm:$0xff]
          %v2508 = vld [vmem:[#allocation14 + $0x28] sm:$0xff]
          %v2509 = vld [vmem:[#allocation14 + $0x30] sm:$0xff]
          %v2510 = vld [vmem:[#allocation14 + $0x38] sm:$0xff]
          %v2511 = vld [vmem:[#allocation14 + $0x40] sm:$0xff]
          %v2512 = vld [vmem:[#allocation14 + $0x48] sm:$0xff]
          %v2513 = vld [vmem:[#allocation14 + $0x50] sm:$0xff]
          %v2514 = vld [vmem:[#allocation14 + $0x58] sm:$0xff]
          %v2515 = vld [vmem:[#allocation14 + $0x60] sm:$0xff]
          %v2516 = vld [vmem:[#allocation14 + $0x68] sm:$0xff]
          %v2517 = vld [vmem:[#allocation14 + $0x70] sm:$0xff]
          %v2518 = vld [vmem:[#allocation14 + $0x78] sm:$0xff]
          %v2519 = vunpack.c.l.s8.bf16 %v2503
          %v2520 = vunpack.c.h.s8.bf16 %v2503
          %v2521 = vunpack.c.l.s8.bf16 %v2504
          %v2522 = vunpack.c.h.s8.bf16 %v2504
          %v2523 = vunpack.c.l.s8.bf16 %v2505
          %v2524 = vunpack.c.h.s8.bf16 %v2505
          %v2525 = vunpack.c.l.s8.bf16 %v2506
          %v2526 = vunpack.c.h.s8.bf16 %v2506
          %v2527 = vunpack.c.l.s8.bf16 %v2507
          %v2528 = vunpack.c.h.s8.bf16 %v2507
          %v2529 = vunpack.c.l.s8.bf16 %v2508
          %v2530 = vunpack.c.h.s8.bf16 %v2508
          %v2531 = vunpack.c.l.s8.bf16 %v2509
          %v2532 = vunpack.c.h.s8.bf16 %v2509
          %v2533 = vunpack.c.l.s8.bf16 %v2510
          %v2534 = vunpack.c.h.s8.bf16 %v2510
          %v2535 = vunpack.c.l.s8.bf16 %v2511
          %v2536 = vunpack.c.h.s8.bf16 %v2511
          %v2537 = vunpack.c.l.s8.bf16 %v2512
          %v2538 = vunpack.c.h.s8.bf16 %v2512
          %v2539 = vunpack.c.l.s8.bf16 %v2513
          %v2540 = vunpack.c.h.s8.bf16 %v2513
          %v2541 = vunpack.c.l.s8.bf16 %v2514
          %v2542 = vunpack.c.h.s8.bf16 %v2514
          %v2543 = vunpack.c.l.s8.bf16 %v2515
          %v2544 = vunpack.c.h.s8.bf16 %v2515
          %v2545 = vunpack.c.l.s8.bf16 %v2516
          %v2546 = vunpack.c.h.s8.bf16 %v2516
          %v2547 = vunpack.c.l.s8.bf16 %v2517
          %v2548 = vunpack.c.h.s8.bf16 %v2517
          %v2549 = vunpack.c.l.s8.bf16 %v2518
          %v2550 = vunpack.c.h.s8.bf16 %v2518
          %2551 = vmatprep.subr.bf16.mxu0 0
          %2552 = vmatpush1.bf16.msra.mxu0 %v2519
          %2553 = vmatprep.subr.bf16.mxu0 0
          %2554 = vmatpush1.bf16.msra.mxu0 %v2520
          %2555 = vmatprep.subr.bf16.mxu0 0
          %2556 = vmatpush1.bf16.msra.mxu0 %v2521
          %2557 = vmatprep.subr.bf16.mxu0 0
          %2558 = vmatpush1.bf16.msra.mxu0 %v2522
          %2559 = vmatprep.subr.bf16.mxu0 0
          %2560 = vmatpush1.bf16.msra.mxu0 %v2523
          %2561 = vmatprep.subr.bf16.mxu0 0
          %2562 = vmatpush1.bf16.msra.mxu0 %v2524
          %2563 = vmatprep.subr.bf16.mxu0 0
          %2564 = vmatpush1.bf16.msra.mxu0 %v2525
          %2565 = vmatprep.subr.bf16.mxu0 0
          %2566 = vmatpush1.bf16.msra.mxu0 %v2526
          %2567 = vmatprep.subr.bf16.mxu0 0
          %2568 = vmatpush1.bf16.msra.mxu0 %v2527
          %2569 = vmatprep.subr.bf16.mxu0 0
          %2570 = vmatpush1.bf16.msra.mxu0 %v2528
          %2571 = vmatprep.subr.bf16.mxu0 0
          %2572 = vmatpush1.bf16.msra.mxu0 %v2529
          %2573 = vmatprep.subr.bf16.mxu0 0
          %2574 = vmatpush1.bf16.msra.mxu0 %v2530
          %2575 = vmatprep.subr.bf16.mxu0 0
          %2576 = vmatpush1.bf16.msra.mxu0 %v2531
          %2577 = vmatprep.subr.bf16.mxu0 0
          %2578 = vmatpush1.bf16.msra.mxu0 %v2532
          %2579 = vmatprep.subr.bf16.mxu0 0
          %2580 = vmatpush1.bf16.msra.mxu0 %v2533
          %2581 = vmatprep.subr.bf16.mxu0 0
          %2582 = vmatpush1.bf16.msra.mxu0 %v2534
          %2583 = vmatprep.mubr.bf16.mxu0 %v2500
          %2584 = vmatmul.mubr.bf16.gmra.mrb[0].mxu0 %v2499
          %v2585 = vpop.f32.mrb[0].mxu0
          %v2586 = vadd.f32 0.0, %v2585
          %v2587 = vpop.f32.mrb[0].mxu0
          %v2588 = vpop.f32.mrb[0].mxu0
          %v2589 = vpop.f32.mrb[0].mxu0
          %2590 = vdwg.mxu0
          %2591 = vmatprep.subr.bf16.mxu0 0
          %2592 = vmatpush1.bf16.msra.mxu0 %v2535
          %2593 = vmatprep.subr.bf16.mxu0 0
          %2594 = vmatpush1.bf16.msra.mxu0 %v2536
          %2595 = vmatprep.subr.bf16.mxu0 0
          %2596 = vmatpush1.bf16.msra.mxu0 %v2537
          %2597 = vmatprep.subr.bf16.mxu0 0
          %2598 = vmatpush1.bf16.msra.mxu0 %v2538
          %2599 = vmatprep.subr.bf16.mxu0 0
          %2600 = vmatpush1.bf16.msra.mxu0 %v2539
          %2601 = vmatprep.subr.bf16.mxu0 0
          %2602 = vmatpush1.bf16.msra.mxu0 %v2540
          %2603 = vmatprep.subr.bf16.mxu0 0
          %2604 = vmatpush1.bf16.msra.mxu0 %v2541
          %2605 = vmatprep.subr.bf16.mxu0 0
          %2606 = vmatpush1.bf16.msra.mxu0 %v2542
          %2607 = vmatprep.subr.bf16.mxu0 0
          %2608 = vmatpush1.bf16.msra.mxu0 %v2543
          %2609 = vmatprep.subr.bf16.mxu0 0
          %2610 = vmatpush1.bf16.msra.mxu0 %v2544
          %2611 = vmatprep.subr.bf16.mxu0 0
          %2612 = vmatpush1.bf16.msra.mxu0 %v2545
          %2613 = vmatprep.subr.bf16.mxu0 0
          %2614 = vmatpush1.bf16.msra.mxu0 %v2546
          %2615 = vmatprep.subr.bf16.mxu0 0
          %2616 = vmatpush1.bf16.msra.mxu0 %v2547
          %2617 = vmatprep.subr.bf16.mxu0 0
          %2618 = vmatpush1.bf16.msra.mxu0 %v2548
          %2619 = vmatprep.subr.bf16.mxu0 0
          %2620 = vmatpush1.bf16.msra.mxu0 %v2549
          %2621 = vmatprep.subr.bf16.mxu0 0
          %2622 = vmatpush1.bf16.msra.mxu0 %v2550
          %2623 = vmatprep.mubr.bf16.mxu0 %v2502
          %2624 = vmatmul.mubr.bf16.gmra.mrb[0].mxu0 %v2501
          %v2625 = vpop.f32.mrb[0].mxu0
          %v2626 = vadd.f32 %v2586, %v2625
          %v2627 = vpop.f32.mrb[0].mxu0
          %v2628 = vpop.f32.mrb[0].mxu0
          %v2629 = vpop.f32.mrb[0].mxu0
          %2630 = vdwg.mxu0
          %v2631 = vld [vmem:[#allocation15] sm:$0x1]
          %v2633 = vlaneseq
          %v2634 = vshrl.u32 %v2633, 7
          %v2635 = vsub.s32 0, %v2634
          %v2636 = vrot.slane %v2631, %v2635
          %v2638 = vmul.f32 %v2626, %v2636
          %v2639 = vld [vmem:[#allocation17] sm:$0x1]
          %v2641 = vlaneseq
          %v2642 = vshrl.u32 %v2641, 7
          %v2643 = vsub.s32 0, %v2642
          %v2644 = vrot.slane %v2639, %v2643
          %v2646 = vadd.f32 %v2638, %v2644
          %2647 = vst [vmem:[#allocation18] sm:$0xff] %v2646
        $region112: #{model_forward.1} parent=59 // pred_fallthru
          _
        // Predicated region
        $region113: #{model_forward.1} parent=59 // pred_check
          %p2648 = pneg %p276
        $region114: #{model_forward.1} parent=59 // pred_check_branch
          %2650 = sbr.rel (%p2648) target = $region116
        $region115: #{model_forward.1} parent=59 // pred_region
          %s2652 = ssub.s32 128, 128
          %2653 = vsyncadd [#allocation5], %s2652
          %s2655 = sshll.u32 [#allocation18], 4
          %s2656 = int_to_ptr.vmem [resolvable:$true] %s2655
          %2658 = dma.vmem_to_hbm [thread:$0]  %s2656, 128, %s10, [#allocation5]
        $region116: #{model_forward.1} parent=59 // pred_fallthru
          _
        // Predicated region
        $region117: #{model_forward.1} parent=59 // pred_check
          %p2659 = pneg %p276
        $region118: #{model_forward.1} parent=59 // pred_check_branch
          %2661 = sbr.rel (%p2659) target = $region120
        $region119: #{model_forward.1} parent=59 // pred_region
          %2662 = dma.done [#allocation5], 128
        $region120: #{model_forward.1} parent=59 // pred_fallthru
          _
      $region60: #{model_forward.1} parent=5 // pred_fallthru
        _
      %p2663 = scmp.le.s32.totalorder 2, %s21
      // Predicated region
      $region121: #{model_forward.1} parent=5 // pred_check
        %p2664 = pneg %p2663
      $region122: #{model_forward.1} parent=5 // pred_check_branch
        %2666 = sbr.rel (%p2664) target = $region124
      $region123: #{model_forward.1} parent=5 // pred_region
        %s2667 = ssub.s32 %s21, 2
      $region124: #{model_forward.1} parent=5 // pred_fallthru
        _
    $region6: #{model_forward.1} parent=1 // loop_footer
      %s25 = sadd.s32 1, %s21
    $region7: #{model_forward.1} parent=1 // loop_footer_branch
      %20 = sbr.rel target = $region3
    $region8: #{model_forward.1} parent=1 // loop_exit
      _
    %2668 = vsyncpa [#allocation4], 1
    %s2669 = scalar_lea.sflag [#allocation4], 1
    %2670 = vsyncpa %s2669, 1
    %2671 = vsyncpa [#allocation7], 1
    %2672 = vsyncpa [#allocation13], 1
    %2673 = vsyncpa [#allocation16], 1
    %2674 = vsyncpa [#allocation5], 1
    %s2675 = scalar_lea.sflag [#allocation5], 1
    %2676 = vsyncpa %s2675, 1

</llo_original>
